<compile_context>
chip_gen: v6e
topology: v6e:2x2x1
jax: 0.10.0
libtpu: 0.0.40
codegen_flags: <defaults>
</compile_context>

<pallas_src>
import math
import functools

import jax
import jax.numpy as jnp
from jax.experimental import pallas as pl
from jax.experimental.pallas import tpu as pltpu


def _mha_kernel(*refs, head_count, dim_per_head, q_tile, fuse_kv, q_from_kv):
    H, D = head_count, dim_per_head
    hd = H * D

    it = iter(refs)
    if fuse_kv:
        x_ref = next(it)
        q_ref = x_ref if q_from_kv else next(it)
        wkv_ref, bkv_ref = next(it), next(it)
    else:
        k_ref, v_ref, q_ref = next(it), next(it), next(it)
        wk_ref, bk_ref, wv_ref, bv_ref = next(it), next(it), next(it), next(it)
    wq_ref, bq_ref, wo_ref, bo_ref = next(it), next(it), next(it), next(it)
    out_ref, top_ref, kup_ref, vup_ref = next(it), next(it), next(it), next(it)
    kh_scr, vh_scr, qh_scr, ctx_scr = next(it), next(it), next(it), next(it)

    qt = pl.program_id(1)
    cd = kh_scr.dtype  # MXU compute dtype (bf16 or f32)

    # ---- K/V projections: once per batch element, kept resident across q tiles ----
    @pl.when(qt == 0)
    def _project_kv():
        if fuse_kv:
            kv_up = (
                jnp.dot(x_ref[0], wkv_ref[...], preferred_element_type=jnp.float32)
                + bkv_ref[...]
            )
            k_up = kv_up[:, :hd]
            v_up = kv_up[:, hd:]
        else:
            k_up = (
                jnp.dot(k_ref[0], wk_ref[...], preferred_element_type=jnp.float32)
                + bk_ref[...]
            )
            v_up = (
                jnp.dot(v_ref[0], wv_ref[...], preferred_element_type=jnp.float32)
                + bv_ref[...]
            )
        # lane-dense slab outputs (split-heads happens in the wrapper)
        kup_ref[0] = k_up.astype(kup_ref.dtype)
        vup_ref[0] = v_up.astype(vup_ref.dtype)
        # head-major VMEM copies for the batched attention contractions
        for h in range(H):
            kh_scr[h] = k_up[:, h * D:(h + 1) * D].astype(cd)
            vh_scr[h] = v_up[:, h * D:(h + 1) * D].astype(cd)

    # ---- Q projection for this q tile (1/sqrt(D) is folded into Wq/bq) ----
    if fuse_kv and q_from_kv:
        start = pl.multiple_of(qt * q_tile, q_tile)
        q_in = q_ref[0, pl.ds(start, q_tile), :]
    else:
        q_in = q_ref[0]
    q_up = jnp.dot(q_in, wq_ref[...], preferred_element_type=jnp.float32) + bq_ref[...]
    for h in range(H):
        qh_scr[h] = q_up[:, h * D:(h + 1) * D].astype(cd)

    # ---- batched per-head attention (heads = leading MXU batch dim) ----
    scores = jnp.einsum(
        "hqd,hkd->hqk", qh_scr[...], kh_scr[...], preferred_element_type=jnp.float32
    )  # [H, TQ, k_len], f32
    m = jnp.max(scores, axis=-1, keepdims=True)
    e = jnp.exp(scores - m)
    attn = e * pl.reciprocal(jnp.sum(e, axis=-1, keepdims=True), approx=True)
    top_ref[0] = attn[0].astype(top_ref.dtype)  # head 0 attention

    # TODO(synk): dropout on attn is the identity here (eval mode).
    ctx_h = jnp.einsum(
        "hqk,hkd->hqd", attn.astype(cd), vh_scr[...], preferred_element_type=jnp.float32
    )  # [H, TQ, D], f32
    for h in range(H):  # combine heads into a lane-dense [TQ, H*D] scratch
        ctx_scr[:, h * D:(h + 1) * D] = ctx_h[h].astype(cd)

    out = (
        jnp.dot(ctx_scr[...], wo_ref[...], preferred_element_type=jnp.float32)
        + bo_ref[...]
    )
    out_ref[0] = out.astype(out_ref.dtype)


def multi_headed_attention(
    key, value, query, params, *, head_count, dim_per_head,
    mxu_dtype=jnp.bfloat16, q_tile=None,
):
    """Forward pass equivalent to MultiHeadedAttention.forward(key, value, query)."""
    B, k_len, model_dim = key.shape
    assert value.shape == key.shape
    q_len = query.shape[1]
    H, D = head_count, dim_per_head
    hd = H * D
    f32 = jnp.float32
    cd = jnp.dtype(mxu_dtype)

    if q_tile is None or q_len % q_tile != 0:
        q_tile = q_len
    n_qt = q_len // q_tile

    wk, bk, wv, bv, wq, bq, wo, bo = params
    scale = 1.0 / math.sqrt(D)
    # fold the query scale into the query projection (exact algebraic identity)
    wq_s = (wq.astype(f32) * scale).astype(cd)
    bq_s = (bq.astype(f32) * scale).reshape(1, hd)
    wo_c = wo.astype(cd)
    bo2 = bo.reshape(1, model_dim).astype(f32)

    fuse_kv = key is value
    q_from_kv = fuse_kv and (query is key)

    kernel = functools.partial(
        _mha_kernel, head_count=H, dim_per_head=D, q_tile=q_tile,
        fuse_kv=fuse_kv, q_from_kv=q_from_kv,
    )

    seq_full = pl.BlockSpec((1, k_len, model_dim), lambda b, qt: (b, 0, 0))
    q_spec = pl.BlockSpec((1, q_tile, model_dim), lambda b, qt: (b, qt, 0))
    mat = lambda r, c: pl.BlockSpec((r, c), lambda b, qt: (0, 0))

    in_specs, args = [], []
    if fuse_kv:
        in_specs.append(seq_full)
        args.append(key.astype(cd))
        if not q_from_kv:
            in_specs.append(q_spec)
            args.append(query.astype(cd))
        wkv = jnp.concatenate([wk, wv], axis=1).astype(cd)          # [model_dim, 2*hd]
        bkv = jnp.concatenate([bk, bv], axis=0).reshape(1, 2 * hd).astype(f32)
        in_specs += [mat(model_dim, 2 * hd), mat(1, 2 * hd)]
        args += [wkv, bkv]
    else:
        in_specs += [seq_full, seq_full, q_spec]
        args += [key.astype(cd), value.astype(cd), query.astype(cd)]
        in_specs += [mat(model_dim, hd), mat(1, hd), mat(model_dim, hd), mat(1, hd)]
        args += [wk.astype(cd), bk.reshape(1, hd).astype(f32),
                 wv.astype(cd), bv.reshape(1, hd).astype(f32)]
    in_specs += [mat(model_dim, hd), mat(1, hd), mat(hd, model_dim), mat(1, model_dim)]
    args += [wq_s, bq_s, wo_c, bo2]

    out_specs = [
        pl.BlockSpec((1, q_tile, model_dim), lambda b, qt: (b, qt, 0)),
        pl.BlockSpec((1, q_tile, k_len), lambda b, qt: (b, qt, 0)),
        pl.BlockSpec((1, k_len, hd), lambda b, qt: (b, 0, 0)),   # lane-dense slab
        pl.BlockSpec((1, k_len, hd), lambda b, qt: (b, 0, 0)),   # lane-dense slab
    ]
    out_shape = [
        jax.ShapeDtypeStruct((B, q_len, model_dim), f32),
        jax.ShapeDtypeStruct((B, q_len, k_len), f32),
        jax.ShapeDtypeStruct((B, k_len, hd), f32),
        jax.ShapeDtypeStruct((B, k_len, hd), f32),
    ]

    out, top_attn, kup, vup = pl.pallas_call(
        kernel,
        grid=(B, n_qt),
        in_specs=in_specs,
        out_specs=out_specs,
        out_shape=out_shape,
        scratch_shapes=[
            pltpu.VMEM((H, k_len, D), cd),    # head-major K
            pltpu.VMEM((H, k_len, D), cd),    # head-major V
            pltpu.VMEM((H, q_tile, D), cd),   # head-major Q tile
            pltpu.VMEM((q_tile, hd), cd),     # combined context
        ],
        compiler_params=pltpu.CompilerParams(
            dimension_semantics=("parallel", "arbitrary")),
    )(*args)

    # split-heads in the wrapper (cheap XLA reshape; keeps kernel stores lane-dense)
    def split(x):  # [B, S, H*D] -> [B*H, S, D]  (matches _split_heads ordering)
        return (
            x.reshape(B, k_len, H, D).transpose(0, 2, 1, 3).reshape(B * H, k_len, D)
        )

    return out, top_attn, (split(kup), split(vup))


def _reference(key, value, query, params, *, head_count, dim_per_head):
    """Pure-JAX reference mirroring the PyTorch forward (eval mode, no mask)."""
    B, k_len, model_dim = key.shape
    q_len = query.shape[1]
    wk, bk, wv, bv, wq, bq, wo, bo = params

    def split(x):
        return (
            x.reshape(B, -1, head_count, dim_per_head)
            .transpose(0, 2, 1, 3)
            .reshape(B * head_count, -1, dim_per_head)
        )

    k_up = split(key @ wk + bk)
    v_up = split(value @ wv + bv)
    q_up = split(query @ wq + bq) / math.sqrt(dim_per_head)
    scores = jnp.einsum("bqd,bkd->bqk", q_up, k_up)
    attn = jax.nn.softmax(scores, axis=-1)
    ctx = jnp.einsum("bqk,bkd->bqd", attn, v_up)
    ctx = (
        ctx.reshape(B, head_count, q_len, dim_per_head)
        .transpose(0, 2, 1, 3)
        .reshape(B, q_len, head_count * dim_per_head)
    )
    out = ctx @ wo + bo
    top = attn.reshape(B, head_count, q_len, k_len)[:, 0]
    return out, top, (k_up, v_up)


if __name__ == "__main__":
    H, D = 4, 8
    hd = H * D
    model_dim = 32
    B = 2

    key0 = jax.random.PRNGKey(0)
    ks = jax.random.split(key0, 16)
    init = lambda k, shape: 0.05 * jax.random.normal(k, shape, jnp.float32)
    params = (
        init(ks[0], (model_dim, hd)), init(ks[1], (hd,)),          # keys
        init(ks[2], (model_dim, hd)), init(ks[3], (hd,)),          # values
        init(ks[4], (model_dim, hd)), init(ks[5], (hd,)),          # query
        init(ks[6], (hd, model_dim)), init(ks[7], (model_dim,)),   # final
    )

    def check(name, got, want, atol, rtol):
        for g, w, label in zip(got, want, ("out", "top_attn", "key_up", "value_up")):
            err = float(jnp.max(jnp.abs(g - w)))
            assert jnp.allclose(g, w, atol=atol, rtol=rtol), (
                f"{name}/{label} mismatch: max abs err {err:.3e}")

    def run_and_ref(k, v, q, *, mxu_dtype, q_tile=None):
        out, top, (kup, vup) = multi_headed_attention(
            k, v, q, params, head_count=H, dim_per_head=D,
            mxu_dtype=mxu_dtype, q_tile=q_tile)
        jax.block_until_ready((out, top, kup, vup))
        r_out, r_top, (r_kup, r_vup) = _reference(
            k, v, q, params, head_count=H, dim_per_head=D)
        return (out, top, kup, vup), (r_out, r_top, r_kup, r_vup)

    # 1) general path: distinct key / value / query, f32 MXU operands
    k1 = jax.random.normal(ks[8], (B, 16, model_dim), jnp.float32)
    v1 = jax.random.normal(ks[9], (B, 16, model_dim), jnp.float32)
    q1 = jax.random.normal(ks[10], (B, 8, model_dim), jnp.float32)
    got, want = run_and_ref(k1, v1, q1, mxu_dtype=jnp.float32)
    check("general_f32", got, want, atol=2e-3, rtol=2e-3)

    # 2) self-attention (key is value is query): fused KV projection, shared-tensor
    #    DMA dedup, q-tile grid axis (q_len=16 -> two tiles of 8), f32 MXU operands
    x2 = jax.random.normal(ks[11], (B, 16, model_dim), jnp.float32)
    got, want = run_and_ref(x2, x2, x2, mxu_dtype=jnp.float32, q_tile=8)
    check("self_attn_f32_tiled", got, want, atol=2e-3, rtol=2e-3)

    # 3) cross-attention (key is value, distinct query): bf16 MXU operands
    mem = jax.random.normal(ks[12], (B, 16, model_dim), jnp.float32)
    q3 = jax.random.normal(ks[13], (B, 8, model_dim), jnp.float32)
    got, want = run_and_ref(mem, mem, q3, mxu_dtype=jnp.bfloat16)
    check("cross_attn_bf16", got, want, atol=3e-2, rtol=3e-2)

    print("KERNEL_OK")
</pallas_src>

<mosaic_0001>
module attributes {stable_mosaic.version = 11 : i64} {
  func.func @_mha_kernel(%arg0: i32, %arg1: i32, %arg2: memref<1x16x32xf32, #tpu.memory_space<vmem>>, %arg3: memref<1x16x32xf32, #tpu.memory_space<vmem>>, %arg4: memref<1x8x32xf32, #tpu.memory_space<vmem>>, %arg5: memref<32x32xf32, #tpu.memory_space<vmem>>, %arg6: memref<1x32xf32, #tpu.memory_space<vmem>>, %arg7: memref<32x32xf32, #tpu.memory_space<vmem>>, %arg8: memref<1x32xf32, #tpu.memory_space<vmem>>, %arg9: memref<32x32xf32, #tpu.memory_space<vmem>>, %arg10: memref<1x32xf32, #tpu.memory_space<vmem>>, %arg11: memref<32x32xf32, #tpu.memory_space<vmem>>, %arg12: memref<1x32xf32, #tpu.memory_space<vmem>>, %arg13: memref<1x8x32xf32, #tpu.memory_space<vmem>>, %arg14: memref<1x8x16xf32, #tpu.memory_space<vmem>>, %arg15: memref<1x16x32xf32, #tpu.memory_space<vmem>>, %arg16: memref<1x16x32xf32, #tpu.memory_space<vmem>>, %arg17: memref<4x16x8xf32, #tpu.memory_space<vmem>>, %arg18: memref<4x16x8xf32, #tpu.memory_space<vmem>>, %arg19: memref<4x8x8xf32, #tpu.memory_space<vmem>>, %arg20: memref<8x32xf32, #tpu.memory_space<vmem>>) attributes {dimension_semantics = [#tpu.dimension_semantics<parallel>, #tpu.dimension_semantics<arbitrary>], iteration_bounds = array<i64: 2, 1>, scalar_prefetch = 0 : i64, scratch_operands = 4 : i64, tpu.core_type = #tpu.core_type<tc>, window_params = [{transform_indices = @transform_0, window_bounds = array<i64: 1, 16, 32>}, {transform_indices = @transform_1, window_bounds = array<i64: 1, 16, 32>}, {transform_indices = @transform_2, window_bounds = array<i64: 1, 8, 32>}, {pipeline_mode = #tpu.pipeline_mode<synchronous>, transform_indices = @transform_3, window_bounds = array<i64: 32, 32>}, {pipeline_mode = #tpu.pipeline_mode<synchronous>, transform_indices = @transform_4, window_bounds = array<i64: 1, 32>}, {pipeline_mode = #tpu.pipeline_mode<synchronous>, transform_indices = @transform_5, window_bounds = array<i64: 32, 32>}, {pipeline_mode = #tpu.pipeline_mode<synchronous>, transform_indices = @transform_6, window_bounds = array<i64: 1, 32>}, {pipeline_mode = #tpu.pipeline_mode<synchronous>, transform_indices = @transform_7, window_bounds = array<i64: 32, 32>}, {pipeline_mode = #tpu.pipeline_mode<synchronous>, transform_indices = @transform_8, window_bounds = array<i64: 1, 32>}, {pipeline_mode = #tpu.pipeline_mode<synchronous>, transform_indices = @transform_9, window_bounds = array<i64: 32, 32>}, {pipeline_mode = #tpu.pipeline_mode<synchronous>, transform_indices = @transform_10, window_bounds = array<i64: 1, 32>}, {transform_indices = @transform_11, window_bounds = array<i64: 1, 8, 32>}, {transform_indices = @transform_12, window_bounds = array<i64: 1, 8, 16>}, {transform_indices = @transform_13, window_bounds = array<i64: 1, 16, 32>}, {transform_indices = @transform_14, window_bounds = array<i64: 1, 16, 32>}]} {
    %c0_i32 = arith.constant 0 : i32
    %0 = arith.cmpi eq, %arg1, %c0_i32 : i32
    %1 = arith.extui %0 : i1 to i32
    %c0_i32_0 = arith.constant 0 : i32
    %2 = arith.cmpi ne, %1, %c0_i32_0 : i32
    scf.if %2 {
      %c0_47 = arith.constant 0 : index
      %c0_48 = arith.constant 0 : index
      %c0_49 = arith.constant 0 : index
      %67 = vector.load %arg2[%c0_47, %c0_48, %c0_49] : memref<1x16x32xf32, #tpu.memory_space<vmem>>, vector<1x16x32xf32>
      %68 = vector.shape_cast %67 : vector<1x16x32xf32> to vector<16x32xf32>
      %c0_50 = arith.constant 0 : index
      %c0_51 = arith.constant 0 : index
      %69 = vector.load %arg5[%c0_50, %c0_51] : memref<32x32xf32, #tpu.memory_space<vmem>>, vector<32x32xf32>
      %cst_52 = arith.constant dense<0.000000e+00> : vector<16x32xf32>
      %70 = tpu.matmul %68, %69, %cst_52 {dimension_numbers = #tpu.dot_dimension_numbers<[1], [0], [0], [1], [0, 0, 1, 1], [], []>} : vector<16x32xf32>, vector<32x32xf32>, vector<16x32xf32> -> vector<16x32xf32>
      %c0_53 = arith.constant 0 : index
      %c0_54 = arith.constant 0 : index
      %71 = vector.load %arg6[%c0_53, %c0_54] : memref<1x32xf32, #tpu.memory_space<vmem>>, vector<1x32xf32>
      %72 = vector.broadcast %71 : vector<1x32xf32> to vector<16x32xf32>
      %73 = arith.addf %70, %72 : vector<16x32xf32>
      %c0_55 = arith.constant 0 : index
      %c0_56 = arith.constant 0 : index
      %c0_57 = arith.constant 0 : index
      %74 = vector.load %arg3[%c0_55, %c0_56, %c0_57] : memref<1x16x32xf32, #tpu.memory_space<vmem>>, vector<1x16x32xf32>
      %75 = vector.shape_cast %74 : vector<1x16x32xf32> to vector<16x32xf32>
      %c0_58 = arith.constant 0 : index
      %c0_59 = arith.constant 0 : index
      %76 = vector.load %arg7[%c0_58, %c0_59] : memref<32x32xf32, #tpu.memory_space<vmem>>, vector<32x32xf32>
      %cst_60 = arith.constant dense<0.000000e+00> : vector<16x32xf32>
      %77 = tpu.matmul %75, %76, %cst_60 {dimension_numbers = #tpu.dot_dimension_numbers<[1], [0], [0], [1], [0, 0, 1, 1], [], []>} : vector<16x32xf32>, vector<32x32xf32>, vector<16x32xf32> -> vector<16x32xf32>
      %c0_61 = arith.constant 0 : index
      %c0_62 = arith.constant 0 : index
      %78 = vector.load %arg8[%c0_61, %c0_62] : memref<1x32xf32, #tpu.memory_space<vmem>>, vector<1x32xf32>
      %79 = vector.broadcast %78 : vector<1x32xf32> to vector<16x32xf32>
      %80 = arith.addf %77, %79 : vector<16x32xf32>
      %c0_63 = arith.constant 0 : index
      %c0_64 = arith.constant 0 : index
      %c0_65 = arith.constant 0 : index
      %81 = vector.load %arg15[%c0_63, %c0_64, %c0_65] : memref<1x16x32xf32, #tpu.memory_space<vmem>>, vector<1x16x32xf32>
      %82 = vector.shape_cast %81 : vector<1x16x32xf32> to vector<16x32xf32>
      %83 = vector.shape_cast %73 : vector<16x32xf32> to vector<1x16x32xf32>
      tpu.vector_store %arg15[%c0_63, %c0_64, %c0_65], %83 {strides = array<i32>} : memref<1x16x32xf32, #tpu.memory_space<vmem>>, vector<1x16x32xf32>,
      %c0_66 = arith.constant 0 : index
      %c0_67 = arith.constant 0 : index
      %c0_68 = arith.constant 0 : index
      %84 = vector.load %arg16[%c0_66, %c0_67, %c0_68] : memref<1x16x32xf32, #tpu.memory_space<vmem>>, vector<1x16x32xf32>
      %85 = vector.shape_cast %84 : vector<1x16x32xf32> to vector<16x32xf32>
      %86 = vector.shape_cast %80 : vector<16x32xf32> to vector<1x16x32xf32>
      tpu.vector_store %arg16[%c0_66, %c0_67, %c0_68], %86 {strides = array<i32>} : memref<1x16x32xf32, #tpu.memory_space<vmem>>, vector<1x16x32xf32>,
      %87 = vector.extract_strided_slice %73 {offsets = [0, 0], sizes = [16, 8], strides = [1, 1]} : vector<16x32xf32> to vector<16x8xf32>
      %c0_69 = arith.constant 0 : index
      %c0_70 = arith.constant 0 : index
      %c0_71 = arith.constant 0 : index
      %88 = vector.load %arg17[%c0_69, %c0_70, %c0_71] : memref<4x16x8xf32, #tpu.memory_space<vmem>>, vector<1x16x8xf32>
      %89 = vector.shape_cast %88 : vector<1x16x8xf32> to vector<16x8xf32>
      %90 = vector.shape_cast %87 : vector<16x8xf32> to vector<1x16x8xf32>
      tpu.vector_store %arg17[%c0_69, %c0_70, %c0_71], %90 {strides = array<i32>} : memref<4x16x8xf32, #tpu.memory_space<vmem>>, vector<1x16x8xf32>,
      %91 = vector.extract_strided_slice %80 {offsets = [0, 0], sizes = [16, 8], strides = [1, 1]} : vector<16x32xf32> to vector<16x8xf32>
      %c0_72 = arith.constant 0 : index
      %c0_73 = arith.constant 0 : index
      %c0_74 = arith.constant 0 : index
      %92 = vector.load %arg18[%c0_72, %c0_73, %c0_74] : memref<4x16x8xf32, #tpu.memory_space<vmem>>, vector<1x16x8xf32>
      %93 = vector.shape_cast %92 : vector<1x16x8xf32> to vector<16x8xf32>
      %94 = vector.shape_cast %91 : vector<16x8xf32> to vector<1x16x8xf32>
      tpu.vector_store %arg18[%c0_72, %c0_73, %c0_74], %94 {strides = array<i32>} : memref<4x16x8xf32, #tpu.memory_space<vmem>>, vector<1x16x8xf32>,
      %95 = vector.extract_strided_slice %73 {offsets = [0, 8], sizes = [16, 8], strides = [1, 1]} : vector<16x32xf32> to vector<16x8xf32>
      %c1_75 = arith.constant 1 : index
      %c0_76 = arith.constant 0 : index
      %c0_77 = arith.constant 0 : index
      %96 = vector.load %arg17[%c1_75, %c0_76, %c0_77] : memref<4x16x8xf32, #tpu.memory_space<vmem>>, vector<1x16x8xf32>
      %97 = vector.shape_cast %96 : vector<1x16x8xf32> to vector<16x8xf32>
      %98 = vector.shape_cast %95 : vector<16x8xf32> to vector<1x16x8xf32>
      tpu.vector_store %arg17[%c1_75, %c0_76, %c0_77], %98 {strides = array<i32>} : memref<4x16x8xf32, #tpu.memory_space<vmem>>, vector<1x16x8xf32>,
      %99 = vector.extract_strided_slice %80 {offsets = [0, 8], sizes = [16, 8], strides = [1, 1]} : vector<16x32xf32> to vector<16x8xf32>
      %c1_78 = arith.constant 1 : index
      %c0_79 = arith.constant 0 : index
      %c0_80 = arith.constant 0 : index
      %100 = vector.load %arg18[%c1_78, %c0_79, %c0_80] : memref<4x16x8xf32, #tpu.memory_space<vmem>>, vector<1x16x8xf32>
      %101 = vector.shape_cast %100 : vector<1x16x8xf32> to vector<16x8xf32>
      %102 = vector.shape_cast %99 : vector<16x8xf32> to vector<1x16x8xf32>
      tpu.vector_store %arg18[%c1_78, %c0_79, %c0_80], %102 {strides = array<i32>} : memref<4x16x8xf32, #tpu.memory_space<vmem>>, vector<1x16x8xf32>,
      %103 = vector.extract_strided_slice %73 {offsets = [0, 16], sizes = [16, 8], strides = [1, 1]} : vector<16x32xf32> to vector<16x8xf32>
      %c2_81 = arith.constant 2 : index
      %c0_82 = arith.constant 0 : index
      %c0_83 = arith.constant 0 : index
      %104 = vector.load %arg17[%c2_81, %c0_82, %c0_83] : memref<4x16x8xf32, #tpu.memory_space<vmem>>, vector<1x16x8xf32>
      %105 = vector.shape_cast %104 : vector<1x16x8xf32> to vector<16x8xf32>
      %106 = vector.shape_cast %103 : vector<16x8xf32> to vector<1x16x8xf32>
      tpu.vector_store %arg17[%c2_81, %c0_82, %c0_83], %106 {strides = array<i32>} : memref<4x16x8xf32, #tpu.memory_space<vmem>>, vector<1x16x8xf32>,
      %107 = vector.extract_strided_slice %80 {offsets = [0, 16], sizes = [16, 8], strides = [1, 1]} : vector<16x32xf32> to vector<16x8xf32>
      %c2_84 = arith.constant 2 : index
      %c0_85 = arith.constant 0 : index
      %c0_86 = arith.constant 0 : index
      %108 = vector.load %arg18[%c2_84, %c0_85, %c0_86] : memref<4x16x8xf32, #tpu.memory_space<vmem>>, vector<1x16x8xf32>
      %109 = vector.shape_cast %108 : vector<1x16x8xf32> to vector<16x8xf32>
      %110 = vector.shape_cast %107 : vector<16x8xf32> to vector<1x16x8xf32>
      tpu.vector_store %arg18[%c2_84, %c0_85, %c0_86], %110 {strides = array<i32>} : memref<4x16x8xf32, #tpu.memory_space<vmem>>, vector<1x16x8xf32>,
      %111 = vector.extract_strided_slice %73 {offsets = [0, 24], sizes = [16, 8], strides = [1, 1]} : vector<16x32xf32> to vector<16x8xf32>
      %c3_87 = arith.constant 3 : index
      %c0_88 = arith.constant 0 : index
      %c0_89 = arith.constant 0 : index
      %112 = vector.load %arg17[%c3_87, %c0_88, %c0_89] : memref<4x16x8xf32, #tpu.memory_space<vmem>>, vector<1x16x8xf32>
      %113 = vector.shape_cast %112 : vector<1x16x8xf32> to vector<16x8xf32>
      %114 = vector.shape_cast %111 : vector<16x8xf32> to vector<1x16x8xf32>
      tpu.vector_store %arg17[%c3_87, %c0_88, %c0_89], %114 {strides = array<i32>} : memref<4x16x8xf32, #tpu.memory_space<vmem>>, vector<1x16x8xf32>,
      %115 = vector.extract_strided_slice %80 {offsets = [0, 24], sizes = [16, 8], strides = [1, 1]} : vector<16x32xf32> to vector<16x8xf32>
      %c3_90 = arith.constant 3 : index
      %c0_91 = arith.constant 0 : index
      %c0_92 = arith.constant 0 : index
      %116 = vector.load %arg18[%c3_90, %c0_91, %c0_92] : memref<4x16x8xf32, #tpu.memory_space<vmem>>, vector<1x16x8xf32>
      %117 = vector.shape_cast %116 : vector<1x16x8xf32> to vector<16x8xf32>
      %118 = vector.shape_cast %115 : vector<16x8xf32> to vector<1x16x8xf32>
      tpu.vector_store %arg18[%c3_90, %c0_91, %c0_92], %118 {strides = array<i32>} : memref<4x16x8xf32, #tpu.memory_space<vmem>>, vector<1x16x8xf32>,
    } else {
    }
    %c0 = arith.constant 0 : index
    %c0_1 = arith.constant 0 : index
    %c0_2 = arith.constant 0 : index
    %3 = vector.load %arg4[%c0, %c0_1, %c0_2] : memref<1x8x32xf32, #tpu.memory_space<vmem>>, vector<1x8x32xf32>
    %4 = vector.shape_cast %3 : vector<1x8x32xf32> to vector<8x32xf32>
    %c0_3 = arith.constant 0 : index
    %c0_4 = arith.constant 0 : index
    %5 = vector.load %arg9[%c0_3, %c0_4] : memref<32x32xf32, #tpu.memory_space<vmem>>, vector<32x32xf32>
    %cst = arith.constant dense<0.000000e+00> : vector<8x32xf32>
    %6 = tpu.matmul %4, %5, %cst {dimension_numbers = #tpu.dot_dimension_numbers<[1], [0], [0], [1], [0, 0, 1, 1], [], []>} : vector<8x32xf32>, vector<32x32xf32>, vector<8x32xf32> -> vector<8x32xf32>
    %c0_5 = arith.constant 0 : index
    %c0_6 = arith.constant 0 : index
    %7 = vector.load %arg10[%c0_5, %c0_6] : memref<1x32xf32, #tpu.memory_space<vmem>>, vector<1x32xf32>
    %8 = vector.broadcast %7 : vector<1x32xf32> to vector<8x32xf32>
    %9 = arith.addf %6, %8 : vector<8x32xf32>
    %10 = vector.extract_strided_slice %9 {offsets = [0, 0], sizes = [8, 8], strides = [1, 1]} : vector<8x32xf32> to vector<8x8xf32>
    %c0_7 = arith.constant 0 : index
    %c0_8 = arith.constant 0 : index
    %c0_9 = arith.constant 0 : index
    %11 = vector.load %arg19[%c0_7, %c0_8, %c0_9] : memref<4x8x8xf32, #tpu.memory_space<vmem>>, vector<1x8x8xf32>
    %12 = vector.shape_cast %11 : vector<1x8x8xf32> to vector<8x8xf32>
    %13 = vector.shape_cast %10 : vector<8x8xf32> to vector<1x8x8xf32>
    tpu.vector_store %arg19[%c0_7, %c0_8, %c0_9], %13 {strides = array<i32>} : memref<4x8x8xf32, #tpu.memory_space<vmem>>, vector<1x8x8xf32>,
    %14 = vector.extract_strided_slice %9 {offsets = [0, 8], sizes = [8, 8], strides = [1, 1]} : vector<8x32xf32> to vector<8x8xf32>
    %c1 = arith.constant 1 : index
    %c0_10 = arith.constant 0 : index
    %c0_11 = arith.constant 0 : index
    %15 = vector.load %arg19[%c1, %c0_10, %c0_11] : memref<4x8x8xf32, #tpu.memory_space<vmem>>, vector<1x8x8xf32>
    %16 = vector.shape_cast %15 : vector<1x8x8xf32> to vector<8x8xf32>
    %17 = vector.shape_cast %14 : vector<8x8xf32> to vector<1x8x8xf32>
    tpu.vector_store %arg19[%c1, %c0_10, %c0_11], %17 {strides = array<i32>} : memref<4x8x8xf32, #tpu.memory_space<vmem>>, vector<1x8x8xf32>,
    %18 = vector.extract_strided_slice %9 {offsets = [0, 16], sizes = [8, 8], strides = [1, 1]} : vector<8x32xf32> to vector<8x8xf32>
    %c2 = arith.constant 2 : index
    %c0_12 = arith.constant 0 : index
    %c0_13 = arith.constant 0 : index
    %19 = vector.load %arg19[%c2, %c0_12, %c0_13] : memref<4x8x8xf32, #tpu.memory_space<vmem>>, vector<1x8x8xf32>
    %20 = vector.shape_cast %19 : vector<1x8x8xf32> to vector<8x8xf32>
    %21 = vector.shape_cast %18 : vector<8x8xf32> to vector<1x8x8xf32>
    tpu.vector_store %arg19[%c2, %c0_12, %c0_13], %21 {strides = array<i32>} : memref<4x8x8xf32, #tpu.memory_space<vmem>>, vector<1x8x8xf32>,
    %22 = vector.extract_strided_slice %9 {offsets = [0, 24], sizes = [8, 8], strides = [1, 1]} : vector<8x32xf32> to vector<8x8xf32>
    %c3 = arith.constant 3 : index
    %c0_14 = arith.constant 0 : index
    %c0_15 = arith.constant 0 : index
    %23 = vector.load %arg19[%c3, %c0_14, %c0_15] : memref<4x8x8xf32, #tpu.memory_space<vmem>>, vector<1x8x8xf32>
    %24 = vector.shape_cast %23 : vector<1x8x8xf32> to vector<8x8xf32>
    %25 = vector.shape_cast %22 : vector<8x8xf32> to vector<1x8x8xf32>
    tpu.vector_store %arg19[%c3, %c0_14, %c0_15], %25 {strides = array<i32>} : memref<4x8x8xf32, #tpu.memory_space<vmem>>, vector<1x8x8xf32>,
    %c0_16 = arith.constant 0 : index
    %c0_17 = arith.constant 0 : index
    %c0_18 = arith.constant 0 : index
    %26 = vector.load %arg19[%c0_16, %c0_17, %c0_18] : memref<4x8x8xf32, #tpu.memory_space<vmem>>, vector<4x8x8xf32>
    %c0_19 = arith.constant 0 : index
    %c0_20 = arith.constant 0 : index
    %c0_21 = arith.constant 0 : index
    %27 = vector.load %arg17[%c0_19, %c0_20, %c0_21] : memref<4x16x8xf32, #tpu.memory_space<vmem>>, vector<4x16x8xf32>
    "tpu.trace_start"() <{level = 10 : i32, message = "hqd,hkd->hqk"}> : () -> ()
    %cst_22 = arith.constant dense<0.000000e+00> : vector<4x8x16xf32>
    %28 = tpu.matmul %26, %27, %cst_22 {dimension_numbers = #tpu.dot_dimension_numbers<[2], [2], [1], [1], [0, 0, 0, 1, 1, 1], [0], [0]>} : vector<4x8x8xf32>, vector<4x16x8xf32>, vector<4x8x16xf32> -> vector<4x8x16xf32>
    "tpu.trace_stop"() : () -> ()
    %cst_23 = arith.constant dense<0xFF800000> : vector<4x8xf32>
    %29 = vector.multi_reduction <maximumf>, %28, %cst_23 [2] : vector<4x8x16xf32> to vector<4x8xf32>
    %30 = vector.shape_cast %29 : vector<4x8xf32> to vector<4x8x1xf32>
    %31 = vector.broadcast %30 : vector<4x8x1xf32> to vector<4x8x16xf32>
    %32 = arith.subf %28, %31 : vector<4x8x16xf32>
    %33 = math.exp %32 : vector<4x8x16xf32>
    %cst_24 = arith.constant dense<0.000000e+00> : vector<4x8xf32>
    %34 = vector.multi_reduction <add>, %33, %cst_24 [2] : vector<4x8x16xf32> to vector<4x8xf32>
    %35 = vector.shape_cast %34 : vector<4x8xf32> to vector<4x8x1xf32>
    %36 = tpu.reciprocal %35 {approx = true} : vector<4x8x1xf32> -> vector<4x8x1xf32>
    %37 = vector.broadcast %36 : vector<4x8x1xf32> to vector<4x8x16xf32>
    %38 = arith.mulf %33, %37 : vector<4x8x16xf32>
    %39 = vector.extract_strided_slice %38 {offsets = [0, 0, 0], sizes = [1, 8, 16], strides = [1, 1, 1]} : vector<4x8x16xf32> to vector<1x8x16xf32>
    %40 = vector.shape_cast %39 : vector<1x8x16xf32> to vector<8x16xf32>
    %c0_25 = arith.constant 0 : index
    %c0_26 = arith.constant 0 : index
    %c0_27 = arith.constant 0 : index
    %41 = vector.load %arg14[%c0_25, %c0_26, %c0_27] : memref<1x8x16xf32, #tpu.memory_space<vmem>>, vector<1x8x16xf32>
    %42 = vector.shape_cast %41 : vector<1x8x16xf32> to vector<8x16xf32>
    %43 = vector.shape_cast %40 : vector<8x16xf32> to vector<1x8x16xf32>
    tpu.vector_store %arg14[%c0_25, %c0_26, %c0_27], %43 {strides = array<i32>} : memref<1x8x16xf32, #tpu.memory_space<vmem>>, vector<1x8x16xf32>,
    %c0_28 = arith.constant 0 : index
    %c0_29 = arith.constant 0 : index
    %c0_30 = arith.constant 0 : index
    %44 = vector.load %arg18[%c0_28, %c0_29, %c0_30] : memref<4x16x8xf32, #tpu.memory_space<vmem>>, vector<4x16x8xf32>
    "tpu.trace_start"() <{level = 10 : i32, message = "hqk,hkd->hqd"}> : () -> ()
    %cst_31 = arith.constant dense<0.000000e+00> : vector<4x8x8xf32>
    %45 = tpu.matmul %38, %44, %cst_31 {dimension_numbers = #tpu.dot_dimension_numbers<[2], [1], [1], [2], [0, 0, 0, 1, 1, 2], [0], [0]>} : vector<4x8x16xf32>, vector<4x16x8xf32>, vector<4x8x8xf32> -> vector<4x8x8xf32>
    "tpu.trace_stop"() : () -> ()
    %46 = vector.extract_strided_slice %45 {offsets = [0, 0, 0], sizes = [1, 8, 8], strides = [1, 1, 1]} : vector<4x8x8xf32> to vector<1x8x8xf32>
    %47 = vector.shape_cast %46 : vector<1x8x8xf32> to vector<8x8xf32>
    %c0_32 = arith.constant 0 : index
    %c0_33 = arith.constant 0 : index
    %48 = vector.load %arg20[%c0_32, %c0_33] : memref<8x32xf32, #tpu.memory_space<vmem>>, vector<8x8xf32>
    tpu.vector_store %arg20[%c0_32, %c0_33], %47 {strides = array<i32>} : memref<8x32xf32, #tpu.memory_space<vmem>>, vector<8x8xf32>,
    %49 = vector.extract_strided_slice %45 {offsets = [1, 0, 0], sizes = [1, 8, 8], strides = [1, 1, 1]} : vector<4x8x8xf32> to vector<1x8x8xf32>
    %50 = vector.shape_cast %49 : vector<1x8x8xf32> to vector<8x8xf32>
    %c0_34 = arith.constant 0 : index
    %c8 = arith.constant 8 : index
    %51 = vector.load %arg20[%c0_34, %c8] : memref<8x32xf32, #tpu.memory_space<vmem>>, vector<8x8xf32>
    tpu.vector_store %arg20[%c0_34, %c8], %50 {strides = array<i32>} : memref<8x32xf32, #tpu.memory_space<vmem>>, vector<8x8xf32>,
    %52 = vector.extract_strided_slice %45 {offsets = [2, 0, 0], sizes = [1, 8, 8], strides = [1, 1, 1]} : vector<4x8x8xf32> to vector<1x8x8xf32>
    %53 = vector.shape_cast %52 : vector<1x8x8xf32> to vector<8x8xf32>
    %c0_35 = arith.constant 0 : index
    %c16 = arith.constant 16 : index
    %54 = vector.load %arg20[%c0_35, %c16] : memref<8x32xf32, #tpu.memory_space<vmem>>, vector<8x8xf32>
    tpu.vector_store %arg20[%c0_35, %c16], %53 {strides = array<i32>} : memref<8x32xf32, #tpu.memory_space<vmem>>, vector<8x8xf32>,
    %55 = vector.extract_strided_slice %45 {offsets = [3, 0, 0], sizes = [1, 8, 8], strides = [1, 1, 1]} : vector<4x8x8xf32> to vector<1x8x8xf32>
    %56 = vector.shape_cast %55 : vector<1x8x8xf32> to vector<8x8xf32>
    %c0_36 = arith.constant 0 : index
    %c24 = arith.constant 24 : index
    %57 = vector.load %arg20[%c0_36, %c24] : memref<8x32xf32, #tpu.memory_space<vmem>>, vector<8x8xf32>
    tpu.vector_store %arg20[%c0_36, %c24], %56 {strides = array<i32>} : memref<8x32xf32, #tpu.memory_space<vmem>>, vector<8x8xf32>,
    %c0_37 = arith.constant 0 : index
    %c0_38 = arith.constant 0 : index
    %58 = vector.load %arg20[%c0_37, %c0_38] : memref<8x32xf32, #tpu.memory_space<vmem>>, vector<8x32xf32>
    %c0_39 = arith.constant 0 : index
    %c0_40 = arith.constant 0 : index
    %59 = vector.load %arg11[%c0_39, %c0_40] : memref<32x32xf32, #tpu.memory_space<vmem>>, vector<32x32xf32>
    %cst_41 = arith.constant dense<0.000000e+00> : vector<8x32xf32>
    %60 = tpu.matmul %58, %59, %cst_41 {dimension_numbers = #tpu.dot_dimension_numbers<[1], [0], [0], [1], [0, 0, 1, 1], [], []>} : vector<8x32xf32>, vector<32x32xf32>, vector<8x32xf32> -> vector<8x32xf32>
    %c0_42 = arith.constant 0 : index
    %c0_43 = arith.constant 0 : index
    %61 = vector.load %arg12[%c0_42, %c0_43] : memref<1x32xf32, #tpu.memory_space<vmem>>, vector<1x32xf32>
    %62 = vector.broadcast %61 : vector<1x32xf32> to vector<8x32xf32>
    %63 = arith.addf %60, %62 : vector<8x32xf32>
    %c0_44 = arith.constant 0 : index
    %c0_45 = arith.constant 0 : index
    %c0_46 = arith.constant 0 : index
    %64 = vector.load %arg13[%c0_44, %c0_45, %c0_46] : memref<1x8x32xf32, #tpu.memory_space<vmem>>, vector<1x8x32xf32>
    %65 = vector.shape_cast %64 : vector<1x8x32xf32> to vector<8x32xf32>
    %66 = vector.shape_cast %63 : vector<8x32xf32> to vector<1x8x32xf32>
    tpu.vector_store %arg13[%c0_44, %c0_45, %c0_46], %66 {strides = array<i32>} : memref<1x8x32xf32, #tpu.memory_space<vmem>>, vector<1x8x32xf32>,
    return
  }
  func.func @transform_0(%arg0: i32, %arg1: i32) -> (i32, i32, i32) {
    %c0_i32 = arith.constant 0 : i32
    %c0_i32_0 = arith.constant 0 : i32
    %c0_i32_1 = arith.constant 0 : i32
    return %arg0, %c0_i32, %c0_i32_0 : i32, i32, i32
  }
  func.func @transform_1(%arg0: i32, %arg1: i32) -> (i32, i32, i32) {
    %c0_i32 = arith.constant 0 : i32
    %c0_i32_0 = arith.constant 0 : i32
    %c0_i32_1 = arith.constant 0 : i32
    return %arg0, %c0_i32, %c0_i32_0 : i32, i32, i32
  }
  func.func @transform_2(%arg0: i32, %arg1: i32) -> (i32, i32, i32) {
    %c0_i32 = arith.constant 0 : i32
    %c0_i32_0 = arith.constant 0 : i32
    return %arg0, %arg1, %c0_i32 : i32, i32, i32
  }
  func.func @transform_3(%arg0: i32, %arg1: i32) -> (i32, i32) {
    %c0_i32 = arith.constant 0 : i32
    %c0_i32_0 = arith.constant 0 : i32
    %c0_i32_1 = arith.constant 0 : i32
    return %c0_i32, %c0_i32_0 : i32, i32
  }
  func.func @transform_4(%arg0: i32, %arg1: i32) -> (i32, i32) {
    %c0_i32 = arith.constant 0 : i32
    %c0_i32_0 = arith.constant 0 : i32
    %c0_i32_1 = arith.constant 0 : i32
    return %c0_i32, %c0_i32_0 : i32, i32
  }
  func.func @transform_5(%arg0: i32, %arg1: i32) -> (i32, i32) {
    %c0_i32 = arith.constant 0 : i32
    %c0_i32_0 = arith.constant 0 : i32
    %c0_i32_1 = arith.constant 0 : i32
    return %c0_i32, %c0_i32_0 : i32, i32
  }
  func.func @transform_6(%arg0: i32, %arg1: i32) -> (i32, i32) {
    %c0_i32 = arith.constant 0 : i32
    %c0_i32_0 = arith.constant 0 : i32
    %c0_i32_1 = arith.constant 0 : i32
    return %c0_i32, %c0_i32_0 : i32, i32
  }
  func.func @transform_7(%arg0: i32, %arg1: i32) -> (i32, i32) {
    %c0_i32 = arith.constant 0 : i32
    %c0_i32_0 = arith.constant 0 : i32
    %c0_i32_1 = arith.constant 0 : i32
    return %c0_i32, %c0_i32_0 : i32, i32
  }
  func.func @transform_8(%arg0: i32, %arg1: i32) -> (i32, i32) {
    %c0_i32 = arith.constant 0 : i32
    %c0_i32_0 = arith.constant 0 : i32
    %c0_i32_1 = arith.constant 0 : i32
    return %c0_i32, %c0_i32_0 : i32, i32
  }
  func.func @transform_9(%arg0: i32, %arg1: i32) -> (i32, i32) {
    %c0_i32 = arith.constant 0 : i32
    %c0_i32_0 = arith.constant 0 : i32
    %c0_i32_1 = arith.constant 0 : i32
    return %c0_i32, %c0_i32_0 : i32, i32
  }
  func.func @transform_10(%arg0: i32, %arg1: i32) -> (i32, i32) {
    %c0_i32 = arith.constant 0 : i32
    %c0_i32_0 = arith.constant 0 : i32
    %c0_i32_1 = arith.constant 0 : i32
    return %c0_i32, %c0_i32_0 : i32, i32
  }
  func.func @transform_11(%arg0: i32, %arg1: i32) -> (i32, i32, i32) {
    %c0_i32 = arith.constant 0 : i32
    %c0_i32_0 = arith.constant 0 : i32
    return %arg0, %arg1, %c0_i32 : i32, i32, i32
  }
  func.func @transform_12(%arg0: i32, %arg1: i32) -> (i32, i32, i32) {
    %c0_i32 = arith.constant 0 : i32
    %c0_i32_0 = arith.constant 0 : i32
    return %arg0, %arg1, %c0_i32 : i32, i32, i32
  }
  func.func @transform_13(%arg0: i32, %arg1: i32) -> (i32, i32, i32) {
    %c0_i32 = arith.constant 0 : i32
    %c0_i32_0 = arith.constant 0 : i32
    %c0_i32_1 = arith.constant 0 : i32
    return %arg0, %c0_i32, %c0_i32_0 : i32, i32, i32
  }
  func.func @transform_14(%arg0: i32, %arg1: i32) -> (i32, i32, i32) {
    %c0_i32 = arith.constant 0 : i32
    %c0_i32_0 = arith.constant 0 : i32
    %c0_i32_1 = arith.constant 0 : i32
    return %arg0, %c0_i32, %c0_i32_0 : i32, i32, i32
  }
}

</mosaic_0001>

<llo_original>
// kernel: tpu_custom_call.1
$region0: #{tpu_custom_call.1}
  #allocation0 [shape = 'u32[]', space=smem, size = 0x4, offset = 0x4, fixed_abs, tag = 'smem constant byte address 0x4 - core index']
  #allocation1 [shape = 'u32[144,128]{1,0:T(1,128)}', space=vmem, size = 0x12000, scoped, tag = 'internal scratch']
  #allocation2 [shape = 'f32[4,16,8]{2,1,0:T(8,128)}', space=vmem, size = 0x8000, scoped, tag = 'scratch operand']
  #allocation3 [shape = 'f32[4,16,8]{2,1,0:T(8,128)}', space=vmem, size = 0x8000, scoped, tag = 'scratch operand']
  #allocation4 [shape = 'f32[4,8,8]{2,1,0:T(8,128)}', space=vmem, size = 0x4000, scoped, tag = 'scratch operand']
  #allocation5 [shape = 'f32[8,32]{1,0:T(8,128)}', space=vmem, size = 0x1000, scoped, tag = 'scratch operand']
  %s0 = inlined_call_operand.hbm [shape: f32[2,16,32], index: 0, kind: input, shape index: {}]
  %s1 = inlined_call_operand.hbm [shape: f32[2,16,32], index: 1, kind: input, shape index: {}]
  %s2 = inlined_call_operand.hbm [shape: f32[2,8,32], index: 2, kind: input, shape index: {}]
  %s3 = inlined_call_operand.hbm [shape: f32[32,32], index: 3, kind: input, shape index: {}]
  %s4 = inlined_call_operand.vmem [shape: f32[1,32], index: 4, kind: input, shape index: {}]
  %s5 = inlined_call_operand.hbm [shape: f32[32,32], index: 5, kind: input, shape index: {}]
  %s6 = inlined_call_operand.vmem [shape: f32[1,32], index: 6, kind: input, shape index: {}]
  %s7 = inlined_call_operand.hbm [shape: f32[32,32], index: 7, kind: input, shape index: {}]
  %s8 = inlined_call_operand.vmem [shape: f32[1,32], index: 8, kind: input, shape index: {}]
  %s9 = inlined_call_operand.hbm [shape: f32[32,32], index: 9, kind: input, shape index: {}]
  %s10 = inlined_call_operand.vmem [shape: f32[1,32], index: 10, kind: input, shape index: {}]
  %s11 = inlined_call_operand.hbm [shape: f32[2,8,32], index: 11, kind: output, shape index: {0}]
  %s12 = inlined_call_operand.hbm [shape: f32[2,8,16], index: 12, kind: output, shape index: {1}]
  %s13 = inlined_call_operand.hbm [shape: f32[2,16,32], index: 13, kind: output, shape index: {2}]
  %s14 = inlined_call_operand.hbm [shape: f32[2,16,32], index: 14, kind: output, shape index: {3}]
  %15 = xla_tuple %s11, %s12, %s13, %s14
  %s16 = sld [smem:[#allocation0]]
  $region133: #{tpu_custom_call.1} parent=0
    _
  %s18 = ssub.s32 1, %s16
  %s19 = scalar_select 0, %s18, %s16
  $region1: #{tpu_custom_call.1} parent=0
    #allocation6 [shape = 'u8[16384]{0}', space=vmem, size = 0x4000, scoped, tag = 'input window, operand 0']
    #allocation7 [shape = 's32[2]{0}', space=sflag, size = 0x8, scoped, tag = 'scoped memory for tpu_custom_call.1']
    #allocation8 [shape = 's32[2]{0}', space=sflag, size = 0x8, scoped, tag = 'scoped memory for tpu_custom_call.1']
    #allocation9 [shape = 'u8[16384]{0}', space=vmem, size = 0x4000, scoped, tag = 'input window, operand 1']
    #allocation10 [shape = 's32[2]{0}', space=sflag, size = 0x8, scoped, tag = 'scoped memory for tpu_custom_call.1']
    #allocation11 [shape = 'u8[8192]{0}', space=vmem, size = 0x2000, scoped, tag = 'input window, operand 2']
    #allocation12 [shape = 'u8[16384]{0}', space=vmem, size = 0x4000, scoped, tag = 'input window, operand 3, single buffered']
    #allocation13 [shape = 's32[1]{0}', space=sflag, size = 0x4, scoped, tag = 'scoped memory for tpu_custom_call.1']
    #allocation14 [shape = 'u8[16384]{0}', space=vmem, size = 0x4000, scoped, tag = 'input window, operand 5, single buffered']
    #allocation15 [shape = 'u8[16384]{0}', space=vmem, size = 0x4000, scoped, tag = 'input window, operand 7, single buffered']
    #allocation16 [shape = 's32[1]{0}', space=sflag, size = 0x4, scoped, tag = 'scoped memory for tpu_custom_call.1']
    #allocation17 [shape = 'u8[16384]{0}', space=vmem, size = 0x4000, scoped, tag = 'input window, operand 9, single buffered']
    #allocation18 [shape = 'u8[8192]{0}', space=vmem, size = 0x2000, scoped, tag = 'output window, operand 0']
    #allocation19 [shape = 'u8[8192]{0}', space=vmem, size = 0x2000, scoped, tag = 'output window, operand 1']
    #allocation20 [shape = 's32[2]{0}', space=sflag, size = 0x8, scoped, tag = 'scoped memory for tpu_custom_call.1']
    #allocation21 [shape = 'u8[16384]{0}', space=vmem, size = 0x4000, scoped, tag = 'output window, operand 2']
    #allocation22 [shape = 'u8[16384]{0}', space=vmem, size = 0x4000, scoped, tag = 'output window, operand 3']
    #allocation23 [shape = 's32[2]{0}', space=sflag, size = 0x8, scoped, tag = 'scoped memory for tpu_custom_call.1']
    %20 = vsyncpa [#allocation7], 0
    %s21 = scalar_lea.sflag [#allocation7], 1
    %22 = vsyncpa %s21, 0
    %23 = vsyncpa [#allocation10], 0
    %s24 = scalar_lea.sflag [#allocation10], 1
    %25 = vsyncpa %s24, 0
    %26 = vsyncpa [#allocation13], 0
    %27 = vsyncpa [#allocation16], 0
    %28 = vsyncpa [#allocation8], 0
    %s29 = scalar_lea.sflag [#allocation8], 1
    %30 = vsyncpa %s29, 0
    %31 = vsyncpa [#allocation20], 0
    %s32 = scalar_lea.sflag [#allocation20], 1
    %33 = vsyncpa %s32, 0
    %34 = vsyncpa [#allocation23], 0
    %s35 = scalar_lea.sflag [#allocation23], 1
    %36 = vsyncpa %s35, 0
    loop: start=0, step=1, limit=4
    $region2: #{tpu_custom_call.1} parent=1 // loop_pre_header
      _
    $region3: #{tpu_custom_call.1} parent=1 // loop_header
      %s38 = sphi 0, %s42
      %p39 = scmp.ge.s32.totalorder %s38, 4
      %s45 = sphi 0, %s57
      %s46 = sphi 0, %s53
      %s47 = sphi 0, %s45
      %s48 = sphi 0, %s46
      %s49 = sphi 0, %s47
      %s50 = sphi 0, %s48
      %s60 = sphi 0, %s62
      %s63 = sphi 0, %s60
      %s64 = sphi 0, %s63
      %s80 = sphi 0, %s64
      %s86 = sphi 0, %s88
      %s89 = sphi 0, %s86
      %s90 = sphi 0, %s89
      %s106 = sphi 0, %s90
      %s114 = sphi 0, %s116
      %s117 = sphi 0, %s114
      %s118 = sphi 0, %s117
      %s134 = sphi 0, %s118
      %s138 = sphi 0, %s138
      %s140 = sphi 0, %s138
      %s141 = sphi 0, %s140
      %s155 = sphi 0, %s141
      %s159 = sphi 0, %s159
      %s161 = sphi 0, %s159
      %s162 = sphi 0, %s161
      %s176 = sphi 0, %s162
      %s180 = sphi 0, %s180
      %s182 = sphi 0, %s180
      %s183 = sphi 0, %s182
      %s197 = sphi 0, %s183
      %s201 = sphi 0, %s201
      %s203 = sphi 0, %s201
      %s204 = sphi 0, %s203
      %s218 = sphi 0, %s204
      %s222 = sphi 0, %s222
      %s224 = sphi 0, %s222
      %s225 = sphi 0, %s224
      %s239 = sphi 0, %s225
      %s243 = sphi 0, %s243
      %s245 = sphi 0, %s243
      %s246 = sphi 0, %s245
      %s260 = sphi 0, %s246
      %s264 = sphi 0, %s264
      %s266 = sphi 0, %s264
      %s267 = sphi 0, %s266
      %s281 = sphi 0, %s267
      %s285 = sphi 0, %s285
      %s287 = sphi 0, %s285
      %s288 = sphi 0, %s287
      %s302 = sphi 0, %s288
      %s310 = sphi 0, %s312
      %s313 = sphi 0, %s310
      %s314 = sphi 0, %s313
      %s330 = sphi 0, %s314
      %s338 = sphi 0, %s340
      %s341 = sphi 0, %s338
      %s342 = sphi 0, %s341
      %s358 = sphi 0, %s342
      %s364 = sphi 0, %s366
      %s367 = sphi 0, %s364
      %s368 = sphi 0, %s367
      %s384 = sphi 0, %s368
      %s390 = sphi 0, %s392
      %s393 = sphi 0, %s390
      %s394 = sphi 0, %s393
      %s410 = sphi 0, %s394
    $region4: #{tpu_custom_call.1} parent=1 // loop_header_branch
      %41 = sbr.rel (%p39) target = $region8
    $region5: #{tpu_custom_call.1} parent=1 // loop_body
      %s43 = ssub.s32 %s38, 1
      %s44 = ssub.s32 %s38, 2
      %s51 = sadd.s32 1, %s46
      %p52 = scmp.ge.s32.totalorder %s51, 1
      %s53 = scalar_select %p52, 0, %s51
      %s54 = sadd.s32 1, %s45
      %s55 = scalar_select %p52, %s54, %s45
      %p56 = scmp.ge.s32.totalorder %s55, 2
      %s57 = scalar_select %p56, 0, %s55
      %s58 = ssub.s32 %s45, %s57
      %p59 = scmp.eq.s32.totalorder %s58, 0
      %s61 = sadd.s32 %s60, 1
      %s62 = scalar_select %p59, %s60, %s61
      %p65 = pneg %p59
      %p66 = scmp.eq.s32.totalorder %s38, 1
      %p67 = por %p65, %p66
      %p68 = scmp.ne.s32.totalorder %s60, %s63
      %p69 = scmp.eq.s32.totalorder %s38, 0
      %p70 = por %p68, %p69
      %p71 = scmp.ne.s32.totalorder %s60, %s63
      %p72 = scmp.eq.s32.totalorder %s43, 1
      %p73 = por %p71, %p72
      %p74 = scmp.ne.s32.totalorder %s63, %s64
      %p75 = scmp.eq.s32.totalorder %s43, 0
      %p76 = por %p74, %p75
      %p77 = scmp.ne.s32.totalorder %s63, %s64
      %p78 = scmp.eq.s32.totalorder %s44, 1
      %p79 = por %p77, %p78
      %p81 = scmp.ne.s32.totalorder %s64, %s80
      %p82 = scmp.eq.s32.totalorder %s44, 0
      %p83 = por %p81, %p82
      %s84 = ssub.s32 %s45, %s57
      %p85 = scmp.eq.s32.totalorder %s84, 0
      %s87 = sadd.s32 %s86, 1
      %s88 = scalar_select %p85, %s86, %s87
      %p91 = pneg %p85
      %p92 = scmp.eq.s32.totalorder %s38, 1
      %p93 = por %p91, %p92
      %p94 = scmp.ne.s32.totalorder %s86, %s89
      %p95 = scmp.eq.s32.totalorder %s38, 0
      %p96 = por %p94, %p95
      %p97 = scmp.ne.s32.totalorder %s86, %s89
      %p98 = scmp.eq.s32.totalorder %s43, 1
      %p99 = por %p97, %p98
      %p100 = scmp.ne.s32.totalorder %s89, %s90
      %p101 = scmp.eq.s32.totalorder %s43, 0
      %p102 = por %p100, %p101
      %p103 = scmp.ne.s32.totalorder %s89, %s90
      %p104 = scmp.eq.s32.totalorder %s44, 1
      %p105 = por %p103, %p104
      %p107 = scmp.ne.s32.totalorder %s90, %s106
      %p108 = scmp.eq.s32.totalorder %s44, 0
      %p109 = por %p107, %p108
      %s110 = ssub.s32 %s45, %s57
      %s111 = ssub.s32 %s46, %s53
      %s112 = sor.u32 %s110, %s111
      %p113 = scmp.eq.s32.totalorder %s112, 0
      %s115 = sadd.s32 %s114, 1
      %s116 = scalar_select %p113, %s114, %s115
      %p119 = pneg %p113
      %p120 = scmp.eq.s32.totalorder %s38, 1
      %p121 = por %p119, %p120
      %p122 = scmp.ne.s32.totalorder %s114, %s117
      %p123 = scmp.eq.s32.totalorder %s38, 0
      %p124 = por %p122, %p123
      %p125 = scmp.ne.s32.totalorder %s114, %s117
      %p126 = scmp.eq.s32.totalorder %s43, 1
      %p127 = por %p125, %p126
      %p128 = scmp.ne.s32.totalorder %s117, %s118
      %p129 = scmp.eq.s32.totalorder %s43, 0
      %p130 = por %p128, %p129
      %p131 = scmp.ne.s32.totalorder %s117, %s118
      %p132 = scmp.eq.s32.totalorder %s44, 1
      %p133 = por %p131, %p132
      %p135 = scmp.ne.s32.totalorder %s118, %s134
      %p136 = scmp.eq.s32.totalorder %s44, 0
      %p137 = por %p135, %p136
      %s139 = sadd.s32 %s138, 1
      %p142 = scmp.eq.s32.totalorder %s38, 1
      %p143 = scmp.ne.s32.totalorder %s138, %s140
      %p144 = scmp.eq.s32.totalorder %s38, 0
      %p145 = por %p143, %p144
      %p146 = scmp.ne.s32.totalorder %s138, %s140
      %p147 = scmp.eq.s32.totalorder %s43, 1
      %p148 = por %p146, %p147
      %p149 = scmp.ne.s32.totalorder %s140, %s141
      %p150 = scmp.eq.s32.totalorder %s43, 0
      %p151 = por %p149, %p150
      %p152 = scmp.ne.s32.totalorder %s140, %s141
      %p153 = scmp.eq.s32.totalorder %s44, 1
      %p154 = por %p152, %p153
      %p156 = scmp.ne.s32.totalorder %s141, %s155
      %p157 = scmp.eq.s32.totalorder %s44, 0
      %p158 = por %p156, %p157
      %s160 = sadd.s32 %s159, 1
      %p163 = scmp.eq.s32.totalorder %s38, 1
      %p164 = scmp.ne.s32.totalorder %s159, %s161
      %p165 = scmp.eq.s32.totalorder %s38, 0
      %p166 = por %p164, %p165
      %p167 = scmp.ne.s32.totalorder %s159, %s161
      %p168 = scmp.eq.s32.totalorder %s43, 1
      %p169 = por %p167, %p168
      %p170 = scmp.ne.s32.totalorder %s161, %s162
      %p171 = scmp.eq.s32.totalorder %s43, 0
      %p172 = por %p170, %p171
      %p173 = scmp.ne.s32.totalorder %s161, %s162
      %p174 = scmp.eq.s32.totalorder %s44, 1
      %p175 = por %p173, %p174
      %p177 = scmp.ne.s32.totalorder %s162, %s176
      %p178 = scmp.eq.s32.totalorder %s44, 0
      %p179 = por %p177, %p178
      %s181 = sadd.s32 %s180, 1
      %p184 = scmp.eq.s32.totalorder %s38, 1
      %p185 = scmp.ne.s32.totalorder %s180, %s182
      %p186 = scmp.eq.s32.totalorder %s38, 0
      %p187 = por %p185, %p186
      %p188 = scmp.ne.s32.totalorder %s180, %s182
      %p189 = scmp.eq.s32.totalorder %s43, 1
      %p190 = por %p188, %p189
      %p191 = scmp.ne.s32.totalorder %s182, %s183
      %p192 = scmp.eq.s32.totalorder %s43, 0
      %p193 = por %p191, %p192
      %p194 = scmp.ne.s32.totalorder %s182, %s183
      %p195 = scmp.eq.s32.totalorder %s44, 1
      %p196 = por %p194, %p195
      %p198 = scmp.ne.s32.totalorder %s183, %s197
      %p199 = scmp.eq.s32.totalorder %s44, 0
      %p200 = por %p198, %p199
      %s202 = sadd.s32 %s201, 1
      %p205 = scmp.eq.s32.totalorder %s38, 1
      %p206 = scmp.ne.s32.totalorder %s201, %s203
      %p207 = scmp.eq.s32.totalorder %s38, 0
      %p208 = por %p206, %p207
      %p209 = scmp.ne.s32.totalorder %s201, %s203
      %p210 = scmp.eq.s32.totalorder %s43, 1
      %p211 = por %p209, %p210
      %p212 = scmp.ne.s32.totalorder %s203, %s204
      %p213 = scmp.eq.s32.totalorder %s43, 0
      %p214 = por %p212, %p213
      %p215 = scmp.ne.s32.totalorder %s203, %s204
      %p216 = scmp.eq.s32.totalorder %s44, 1
      %p217 = por %p215, %p216
      %p219 = scmp.ne.s32.totalorder %s204, %s218
      %p220 = scmp.eq.s32.totalorder %s44, 0
      %p221 = por %p219, %p220
      %s223 = sadd.s32 %s222, 1
      %p226 = scmp.eq.s32.totalorder %s38, 1
      %p227 = scmp.ne.s32.totalorder %s222, %s224
      %p228 = scmp.eq.s32.totalorder %s38, 0
      %p229 = por %p227, %p228
      %p230 = scmp.ne.s32.totalorder %s222, %s224
      %p231 = scmp.eq.s32.totalorder %s43, 1
      %p232 = por %p230, %p231
      %p233 = scmp.ne.s32.totalorder %s224, %s225
      %p234 = scmp.eq.s32.totalorder %s43, 0
      %p235 = por %p233, %p234
      %p236 = scmp.ne.s32.totalorder %s224, %s225
      %p237 = scmp.eq.s32.totalorder %s44, 1
      %p238 = por %p236, %p237
      %p240 = scmp.ne.s32.totalorder %s225, %s239
      %p241 = scmp.eq.s32.totalorder %s44, 0
      %p242 = por %p240, %p241
      %s244 = sadd.s32 %s243, 1
      %p247 = scmp.eq.s32.totalorder %s38, 1
      %p248 = scmp.ne.s32.totalorder %s243, %s245
      %p249 = scmp.eq.s32.totalorder %s38, 0
      %p250 = por %p248, %p249
      %p251 = scmp.ne.s32.totalorder %s243, %s245
      %p252 = scmp.eq.s32.totalorder %s43, 1
      %p253 = por %p251, %p252
      %p254 = scmp.ne.s32.totalorder %s245, %s246
      %p255 = scmp.eq.s32.totalorder %s43, 0
      %p256 = por %p254, %p255
      %p257 = scmp.ne.s32.totalorder %s245, %s246
      %p258 = scmp.eq.s32.totalorder %s44, 1
      %p259 = por %p257, %p258
      %p261 = scmp.ne.s32.totalorder %s246, %s260
      %p262 = scmp.eq.s32.totalorder %s44, 0
      %p263 = por %p261, %p262
      %s265 = sadd.s32 %s264, 1
      %p268 = scmp.eq.s32.totalorder %s38, 1
      %p269 = scmp.ne.s32.totalorder %s264, %s266
      %p270 = scmp.eq.s32.totalorder %s38, 0
      %p271 = por %p269, %p270
      %p272 = scmp.ne.s32.totalorder %s264, %s266
      %p273 = scmp.eq.s32.totalorder %s43, 1
      %p274 = por %p272, %p273
      %p275 = scmp.ne.s32.totalorder %s266, %s267
      %p276 = scmp.eq.s32.totalorder %s43, 0
      %p277 = por %p275, %p276
      %p278 = scmp.ne.s32.totalorder %s266, %s267
      %p279 = scmp.eq.s32.totalorder %s44, 1
      %p280 = por %p278, %p279
      %p282 = scmp.ne.s32.totalorder %s267, %s281
      %p283 = scmp.eq.s32.totalorder %s44, 0
      %p284 = por %p282, %p283
      %s286 = sadd.s32 %s285, 1
      %p289 = scmp.eq.s32.totalorder %s38, 1
      %p290 = scmp.ne.s32.totalorder %s285, %s287
      %p291 = scmp.eq.s32.totalorder %s38, 0
      %p292 = por %p290, %p291
      %p293 = scmp.ne.s32.totalorder %s285, %s287
      %p294 = scmp.eq.s32.totalorder %s43, 1
      %p295 = por %p293, %p294
      %p296 = scmp.ne.s32.totalorder %s287, %s288
      %p297 = scmp.eq.s32.totalorder %s43, 0
      %p298 = por %p296, %p297
      %p299 = scmp.ne.s32.totalorder %s287, %s288
      %p300 = scmp.eq.s32.totalorder %s44, 1
      %p301 = por %p299, %p300
      %p303 = scmp.ne.s32.totalorder %s288, %s302
      %p304 = scmp.eq.s32.totalorder %s44, 0
      %p305 = por %p303, %p304
      %s306 = ssub.s32 %s45, %s57
      %s307 = ssub.s32 %s46, %s53
      %s308 = sor.u32 %s306, %s307
      %p309 = scmp.eq.s32.totalorder %s308, 0
      %s311 = sadd.s32 %s310, 1
      %s312 = scalar_select %p309, %s310, %s311
      %p315 = pneg %p309
      %p316 = scmp.eq.s32.totalorder %s38, 1
      %p317 = por %p315, %p316
      %p318 = scmp.ne.s32.totalorder %s310, %s313
      %p319 = scmp.eq.s32.totalorder %s38, 0
      %p320 = por %p318, %p319
      %p321 = scmp.ne.s32.totalorder %s310, %s313
      %p322 = scmp.eq.s32.totalorder %s43, 1
      %p323 = por %p321, %p322
      %p324 = scmp.ne.s32.totalorder %s313, %s314
      %p325 = scmp.eq.s32.totalorder %s43, 0
      %p326 = por %p324, %p325
      %p327 = scmp.ne.s32.totalorder %s313, %s314
      %p328 = scmp.eq.s32.totalorder %s44, 1
      %p329 = por %p327, %p328
      %p331 = scmp.ne.s32.totalorder %s314, %s330
      %p332 = scmp.eq.s32.totalorder %s44, 0
      %p333 = por %p331, %p332
      %s334 = ssub.s32 %s45, %s57
      %s335 = ssub.s32 %s46, %s53
      %s336 = sor.u32 %s334, %s335
      %p337 = scmp.eq.s32.totalorder %s336, 0
      %s339 = sadd.s32 %s338, 1
      %s340 = scalar_select %p337, %s338, %s339
      %p343 = pneg %p337
      %p344 = scmp.eq.s32.totalorder %s38, 1
      %p345 = por %p343, %p344
      %p346 = scmp.ne.s32.totalorder %s338, %s341
      %p347 = scmp.eq.s32.totalorder %s38, 0
      %p348 = por %p346, %p347
      %p349 = scmp.ne.s32.totalorder %s338, %s341
      %p350 = scmp.eq.s32.totalorder %s43, 1
      %p351 = por %p349, %p350
      %p352 = scmp.ne.s32.totalorder %s341, %s342
      %p353 = scmp.eq.s32.totalorder %s43, 0
      %p354 = por %p352, %p353
      %p355 = scmp.ne.s32.totalorder %s341, %s342
      %p356 = scmp.eq.s32.totalorder %s44, 1
      %p357 = por %p355, %p356
      %p359 = scmp.ne.s32.totalorder %s342, %s358
      %p360 = scmp.eq.s32.totalorder %s44, 0
      %p361 = por %p359, %p360
      %s362 = ssub.s32 %s45, %s57
      %p363 = scmp.eq.s32.totalorder %s362, 0
      %s365 = sadd.s32 %s364, 1
      %s366 = scalar_select %p363, %s364, %s365
      %p369 = pneg %p363
      %p370 = scmp.eq.s32.totalorder %s38, 1
      %p371 = por %p369, %p370
      %p372 = scmp.ne.s32.totalorder %s364, %s367
      %p373 = scmp.eq.s32.totalorder %s38, 0
      %p374 = por %p372, %p373
      %p375 = scmp.ne.s32.totalorder %s364, %s367
      %p376 = scmp.eq.s32.totalorder %s43, 1
      %p377 = por %p375, %p376
      %p378 = scmp.ne.s32.totalorder %s367, %s368
      %p379 = scmp.eq.s32.totalorder %s43, 0
      %p380 = por %p378, %p379
      %p381 = scmp.ne.s32.totalorder %s367, %s368
      %p382 = scmp.eq.s32.totalorder %s44, 1
      %p383 = por %p381, %p382
      %p385 = scmp.ne.s32.totalorder %s368, %s384
      %p386 = scmp.eq.s32.totalorder %s44, 0
      %p387 = por %p385, %p386
      %s388 = ssub.s32 %s45, %s57
      %p389 = scmp.eq.s32.totalorder %s388, 0
      %s391 = sadd.s32 %s390, 1
      %s392 = scalar_select %p389, %s390, %s391
      %p395 = pneg %p389
      %p396 = scmp.eq.s32.totalorder %s38, 1
      %p397 = por %p395, %p396
      %p398 = scmp.ne.s32.totalorder %s390, %s393
      %p399 = scmp.eq.s32.totalorder %s38, 0
      %p400 = por %p398, %p399
      %p401 = scmp.ne.s32.totalorder %s390, %s393
      %p402 = scmp.eq.s32.totalorder %s43, 1
      %p403 = por %p401, %p402
      %p404 = scmp.ne.s32.totalorder %s393, %s394
      %p405 = scmp.eq.s32.totalorder %s43, 0
      %p406 = por %p404, %p405
      %p407 = scmp.ne.s32.totalorder %s393, %s394
      %p408 = scmp.eq.s32.totalorder %s44, 1
      %p409 = por %p407, %p408
      %p411 = scmp.ne.s32.totalorder %s394, %s410
      %p412 = scmp.eq.s32.totalorder %s44, 0
      %p413 = por %p411, %p412
      %p414 = scmp.le.s32.totalorder 1, %s38
      %p415 = scmp.lt.s32.totalorder %s38, 3
      %p416 = pnand %p414, %p415
      %p417 = pneg %p416
      // Predicated region
      $region9: #{tpu_custom_call.1} parent=5 // pred_check
        _
      $region10: #{tpu_custom_call.1} parent=5 // pred_check_branch
        %419 = sbr.rel (%p416) target = $region12
      $region11: #{tpu_custom_call.1} parent=5 // pred_region
        %s420 = ssub.s32 %s38, 1
        // Predicated region
        $region13: #{tpu_custom_call.1} parent=11 // pred_check
          %p421 = pneg %p151
        $region14: #{tpu_custom_call.1} parent=11 // pred_check_branch
          %423 = sbr.rel (%p421) target = $region16
        $region15: #{tpu_custom_call.1} parent=11 // pred_region
          %s425 = ssub.s32 512, 512
          %426 = vsyncadd [#allocation13], %s425
          %s427 = sshll.u32 [#allocation12], 4
          %s428 = int_to_ptr.vmem [resolvable:$true] %s427
          %433 = dma.hbm_to_vmem [thread:$0]  %s3, 512, %s428, [#allocation13], 128, 128, 8
        $region16: #{tpu_custom_call.1} parent=11 // pred_fallthru
          _
        // Predicated region
        $region17: #{tpu_custom_call.1} parent=11 // pred_check
          %p434 = pneg %p172
        $region18: #{tpu_custom_call.1} parent=11 // pred_check_branch
          %436 = sbr.rel (%p434) target = $region20
        $region19: #{tpu_custom_call.1} parent=11 // pred_region
          _
        $region20: #{tpu_custom_call.1} parent=11 // pred_fallthru
          _
        // Predicated region
        $region21: #{tpu_custom_call.1} parent=11 // pred_check
          %p437 = pneg %p193
        $region22: #{tpu_custom_call.1} parent=11 // pred_check_branch
          %439 = sbr.rel (%p437) target = $region24
        $region23: #{tpu_custom_call.1} parent=11 // pred_region
          %s441 = ssub.s32 512, 512
          %442 = vsyncadd [#allocation13], %s441
          %s443 = sshll.u32 [#allocation14], 4
          %s444 = int_to_ptr.vmem [resolvable:$true] %s443
          %449 = dma.hbm_to_vmem [thread:$0]  %s5, 512, %s444, [#allocation13], 128, 128, 8
        $region24: #{tpu_custom_call.1} parent=11 // pred_fallthru
          _
        // Predicated region
        $region25: #{tpu_custom_call.1} parent=11 // pred_check
          %p450 = pneg %p214
        $region26: #{tpu_custom_call.1} parent=11 // pred_check_branch
          %452 = sbr.rel (%p450) target = $region28
        $region27: #{tpu_custom_call.1} parent=11 // pred_region
          _
        $region28: #{tpu_custom_call.1} parent=11 // pred_fallthru
          _
        // Predicated region
        $region29: #{tpu_custom_call.1} parent=11 // pred_check
          %p453 = pneg %p235
        $region30: #{tpu_custom_call.1} parent=11 // pred_check_branch
          %455 = sbr.rel (%p453) target = $region32
        $region31: #{tpu_custom_call.1} parent=11 // pred_region
          %s457 = ssub.s32 512, 512
          %458 = vsyncadd [#allocation16], %s457
          %s459 = sshll.u32 [#allocation15], 4
          %s460 = int_to_ptr.vmem [resolvable:$true] %s459
          %465 = dma.hbm_to_vmem [thread:$0]  %s7, 512, %s460, [#allocation16], 128, 128, 8
        $region32: #{tpu_custom_call.1} parent=11 // pred_fallthru
          _
        // Predicated region
        $region33: #{tpu_custom_call.1} parent=11 // pred_check
          %p466 = pneg %p256
        $region34: #{tpu_custom_call.1} parent=11 // pred_check_branch
          %468 = sbr.rel (%p466) target = $region36
        $region35: #{tpu_custom_call.1} parent=11 // pred_region
          _
        $region36: #{tpu_custom_call.1} parent=11 // pred_fallthru
          _
        // Predicated region
        $region37: #{tpu_custom_call.1} parent=11 // pred_check
          %p469 = pneg %p277
        $region38: #{tpu_custom_call.1} parent=11 // pred_check_branch
          %471 = sbr.rel (%p469) target = $region40
        $region39: #{tpu_custom_call.1} parent=11 // pred_region
          %s473 = ssub.s32 512, 512
          %474 = vsyncadd [#allocation16], %s473
          %s475 = sshll.u32 [#allocation17], 4
          %s476 = int_to_ptr.vmem [resolvable:$true] %s475
          %481 = dma.hbm_to_vmem [thread:$0]  %s9, 512, %s476, [#allocation16], 128, 128, 8
        $region40: #{tpu_custom_call.1} parent=11 // pred_fallthru
          _
        // Predicated region
        $region41: #{tpu_custom_call.1} parent=11 // pred_check
          %p482 = pneg %p298
        $region42: #{tpu_custom_call.1} parent=11 // pred_check_branch
          %484 = sbr.rel (%p482) target = $region44
        $region43: #{tpu_custom_call.1} parent=11 // pred_region
          _
        $region44: #{tpu_custom_call.1} parent=11 // pred_fallthru
          _
      $region12: #{tpu_custom_call.1} parent=5 // pred_fallthru
        _
      %p485 = scmp.lt.s32.totalorder %s38, 2
      // Predicated region
      $region45: #{tpu_custom_call.1} parent=5 // pred_check
        %p486 = pneg %p485
      $region46: #{tpu_custom_call.1} parent=5 // pred_check_branch
        %488 = sbr.rel (%p486) target = $region48
      $region47: #{tpu_custom_call.1} parent=5 // pred_region
        // Predicated region
        $region49: #{tpu_custom_call.1} parent=47 // pred_check
          %p489 = pneg %p70
        $region50: #{tpu_custom_call.1} parent=47 // pred_check_branch
          %491 = sbr.rel (%p489) target = $region52
        $region51: #{tpu_custom_call.1} parent=47 // pred_region
          %s492 = sand.u32 %s60, 1
          %s493 = scalar_lea.sflag [#allocation7], %s492
          %s494 = sand.u32 %s60, 1
          %s495 = smul.addr %s494, 16
          %s496 = scalar_lea.vmem [#allocation6], %s495
          %s498 = ssub.s32 256, 256
          %499 = vsyncadd %s493, %s498
          %s500 = smul.addr %s45, 2
          %s501 = smul.addr %s500, 128
          %s502 = scalar_lea.hbm %s0, %s501
          %s503 = sshll.u32 %s496, 4
          %s504 = int_to_ptr.vmem [resolvable:$true] %s503
          %509 = dma.hbm_to_vmem [thread:$0]  %s502, 256, %s504, %s493, 128, 128, 8
        $region52: #{tpu_custom_call.1} parent=47 // pred_fallthru
          _
        // Predicated region
        $region53: #{tpu_custom_call.1} parent=47 // pred_check
          %p510 = pneg %p96
        $region54: #{tpu_custom_call.1} parent=47 // pred_check_branch
          %512 = sbr.rel (%p510) target = $region56
        $region55: #{tpu_custom_call.1} parent=47 // pred_region
          %s513 = sand.u32 %s38, 1
          %s514 = scalar_lea.sflag [#allocation10], %s513
          %s515 = sand.u32 %s86, 1
          %s516 = smul.addr %s515, 16
          %s517 = scalar_lea.vmem [#allocation9], %s516
          %s519 = ssub.s32 256, 256
          %520 = vsyncadd %s514, %s519
          %s521 = smul.addr %s45, 2
          %s522 = smul.addr %s521, 128
          %s523 = scalar_lea.hbm %s1, %s522
          %s524 = sshll.u32 %s517, 4
          %s525 = int_to_ptr.vmem [resolvable:$true] %s524
          %530 = dma.hbm_to_vmem [thread:$0]  %s523, 256, %s525, %s514, 128, 128, 8
        $region56: #{tpu_custom_call.1} parent=47 // pred_fallthru
          _
        // Predicated region
        $region57: #{tpu_custom_call.1} parent=47 // pred_check
          %p531 = pneg %p124
        $region58: #{tpu_custom_call.1} parent=47 // pred_check_branch
          %533 = sbr.rel (%p531) target = $region60
        $region59: #{tpu_custom_call.1} parent=47 // pred_region
          %s534 = sand.u32 %s38, 1
          %s535 = scalar_lea.sflag [#allocation10], %s534
          %s536 = sand.u32 %s114, 1
          %s537 = smul.addr %s536, 8
          %s538 = scalar_lea.vmem [#allocation11], %s537
          %s540 = ssub.s32 128, 128
          %541 = vsyncadd %s535, %s540
          %s542 = sadd.s32 %s46, %s45
          %s543 = smul.addr %s542, 128
          %s544 = scalar_lea.hbm %s2, %s543
          %s546 = sshll.u32 %s538, 4
          %s547 = int_to_ptr.vmem [resolvable:$true] %s546
          %549 = dma.hbm_to_vmem [thread:$0]  %s544, 128, %s547, %s535
        $region60: #{tpu_custom_call.1} parent=47 // pred_fallthru
          _
      $region48: #{tpu_custom_call.1} parent=5 // pred_fallthru
        _
      %p550 = scmp.le.s32.totalorder 1, %s38
      %p551 = scmp.lt.s32.totalorder %s38, 3
      %p552 = pnand %p550, %p551
      %p553 = pneg %p552
      // Predicated region
      $region61: #{tpu_custom_call.1} parent=5 // pred_check
        _
      $region62: #{tpu_custom_call.1} parent=5 // pred_check_branch
        %555 = sbr.rel (%p552) target = $region64
      $region63: #{tpu_custom_call.1} parent=5 // pred_region
        %s556 = ssub.s32 %s38, 1
        %s557 = sand.u32 %s63, 1
        %s558 = scalar_lea.sflag [#allocation7], %s557
        %s559 = sand.u32 %s63, 1
        %s560 = smul.addr %s559, 16
        %s561 = scalar_lea.vmem [#allocation6], %s560
        // Predicated region
        $region65: #{tpu_custom_call.1} parent=63 // pred_check
          %p562 = pneg %p76
        $region66: #{tpu_custom_call.1} parent=63 // pred_check_branch
          %564 = sbr.rel (%p562) target = $region68
        $region67: #{tpu_custom_call.1} parent=63 // pred_region
          %565 = dma.done %s558, 256
        $region68: #{tpu_custom_call.1} parent=63 // pred_fallthru
          _
        %s566 = sand.u32 %s43, 1
        %s567 = scalar_lea.sflag [#allocation10], %s566
        %s568 = sand.u32 %s89, 1
        %s569 = smul.addr %s568, 16
        %s570 = scalar_lea.vmem [#allocation9], %s569
        // Predicated region
        $region69: #{tpu_custom_call.1} parent=63 // pred_check
          %p571 = pneg %p102
        $region70: #{tpu_custom_call.1} parent=63 // pred_check_branch
          %573 = sbr.rel (%p571) target = $region72
        $region71: #{tpu_custom_call.1} parent=63 // pred_region
          %574 = dma.done %s567, 256
        $region72: #{tpu_custom_call.1} parent=63 // pred_fallthru
          _
        %s575 = sand.u32 %s43, 1
        %s576 = scalar_lea.sflag [#allocation10], %s575
        %s577 = sand.u32 %s117, 1
        %s578 = smul.addr %s577, 8
        %s579 = scalar_lea.vmem [#allocation11], %s578
        // Predicated region
        $region73: #{tpu_custom_call.1} parent=63 // pred_check
          %p580 = pneg %p130
        $region74: #{tpu_custom_call.1} parent=63 // pred_check_branch
          %582 = sbr.rel (%p580) target = $region76
        $region75: #{tpu_custom_call.1} parent=63 // pred_region
          %583 = dma.done %s576, 128
        $region76: #{tpu_custom_call.1} parent=63 // pred_fallthru
          _
        // Predicated region
        $region77: #{tpu_custom_call.1} parent=63 // pred_check
          %p584 = pneg %p151
        $region78: #{tpu_custom_call.1} parent=63 // pred_check_branch
          %586 = sbr.rel (%p584) target = $region80
        $region79: #{tpu_custom_call.1} parent=63 // pred_region
          %587 = dma.done [#allocation13], 512
        $region80: #{tpu_custom_call.1} parent=63 // pred_fallthru
          _
        // Predicated region
        $region81: #{tpu_custom_call.1} parent=63 // pred_check
          %p588 = pneg %p193
        $region82: #{tpu_custom_call.1} parent=63 // pred_check_branch
          %590 = sbr.rel (%p588) target = $region84
        $region83: #{tpu_custom_call.1} parent=63 // pred_region
          %591 = dma.done [#allocation13], 512
        $region84: #{tpu_custom_call.1} parent=63 // pred_fallthru
          _
        // Predicated region
        $region85: #{tpu_custom_call.1} parent=63 // pred_check
          %p592 = pneg %p235
        $region86: #{tpu_custom_call.1} parent=63 // pred_check_branch
          %594 = sbr.rel (%p592) target = $region88
        $region87: #{tpu_custom_call.1} parent=63 // pred_region
          %595 = dma.done [#allocation16], 512
        $region88: #{tpu_custom_call.1} parent=63 // pred_fallthru
          _
        // Predicated region
        $region89: #{tpu_custom_call.1} parent=63 // pred_check
          %p596 = pneg %p277
        $region90: #{tpu_custom_call.1} parent=63 // pred_check_branch
          %598 = sbr.rel (%p596) target = $region92
        $region91: #{tpu_custom_call.1} parent=63 // pred_region
          %599 = dma.done [#allocation16], 512
        $region92: #{tpu_custom_call.1} parent=63 // pred_fallthru
          _
        %s600 = sand.u32 %s63, 1
        %s601 = scalar_lea.sflag [#allocation7], %s600
        %s602 = sand.u32 %s63, 1
        %s603 = smul.addr %s602, 16
        %s604 = scalar_lea.vmem [#allocation6], %s603
        %p605 = pneg %p76
        %p606 = pneg %p73
        %s607 = sand.u32 %s43, 1
        %s608 = scalar_lea.sflag [#allocation10], %s607
        %s609 = sand.u32 %s89, 1
        %s610 = smul.addr %s609, 16
        %s611 = scalar_lea.vmem [#allocation9], %s610
        %p612 = pneg %p102
        %p613 = pneg %p99
        %s614 = sand.u32 %s43, 1
        %s615 = scalar_lea.sflag [#allocation10], %s614
        %s616 = sand.u32 %s117, 1
        %s617 = smul.addr %s616, 8
        %s618 = scalar_lea.vmem [#allocation11], %s617
        %p619 = pneg %p130
        %p620 = pneg %p127
        %p621 = pneg %p151
        %p622 = pneg %p148
        %p623 = pneg %p172
        %p624 = pneg %p169
        %p625 = pneg %p193
        %p626 = pneg %p190
        %p627 = pneg %p214
        %p628 = pneg %p211
        %p629 = pneg %p235
        %p630 = pneg %p232
        %p631 = pneg %p256
        %p632 = pneg %p253
        %p633 = pneg %p277
        %p634 = pneg %p274
        %p635 = pneg %p298
        %p636 = pneg %p295
        %p637 = pneg %p326
        %p638 = pneg %p323
        %s639 = sand.u32 %s313, 1
        %s640 = scalar_lea.sflag [#allocation8], %s639
        %s641 = sand.u32 %s313, 1
        %s642 = smul.addr %s641, 8
        %s643 = scalar_lea.vmem [#allocation18], %s642
        %p644 = pneg %p354
        %p645 = pneg %p351
        %s646 = sand.u32 %s43, 1
        %s647 = scalar_lea.sflag [#allocation20], %s646
        %s648 = sand.u32 %s341, 1
        %s649 = smul.addr %s648, 8
        %s650 = scalar_lea.vmem [#allocation19], %s649
        %p651 = pneg %p380
        %p652 = pneg %p377
        %s653 = sand.u32 %s43, 1
        %s654 = scalar_lea.sflag [#allocation20], %s653
        %s655 = sand.u32 %s367, 1
        %s656 = smul.addr %s655, 16
        %s657 = scalar_lea.vmem [#allocation21], %s656
        %p658 = pneg %p406
        %p659 = pneg %p403
        %s660 = sand.u32 %s393, 1
        %s661 = scalar_lea.sflag [#allocation23], %s660
        %s662 = sand.u32 %s393, 1
        %s663 = smul.addr %s662, 16
        %s664 = scalar_lea.vmem [#allocation22], %s663
        %p665 = scmp.eq.s32.totalorder %s48, 0
        // Predicated region
        $region93: #{tpu_custom_call.1} parent=63 // pred_check
          %p666 = pneg %p665
        $region94: #{tpu_custom_call.1} parent=63 // pred_check_branch
          %668 = sbr.rel (%p666) target = $region96
        $region95: #{tpu_custom_call.1} parent=63 // pred_region
          %v669 = vld [vmem:[%s561] sm:$0xff]
          %v670 = vld [vmem:[%s561 + $0x8] sm:$0xff]
          %v671 = vld [vmem:[#allocation12] sm:$0xff]
          %v672 = vld [vmem:[#allocation12 + $0x8] sm:$0xff]
          %v673 = vld [vmem:[#allocation12 + $0x10] sm:$0xff]
          %v674 = vld [vmem:[#allocation12 + $0x18] sm:$0xff]
          %v675 = vld [vmem:[%s4] sm:$0x1]
          %v677 = vlaneseq
          %v678 = vshrl.u32 %v677, 7
          %v679 = vsub.s32 0, %v678
          %v680 = vrot.slane %v675, %v679
          %vm682 = vcmask 261120
          %v684 = vsel %vm682, %v669, 0
          %v687 = vsel %vm682, %v670, 0
          %689 = vmatprep.subr.mxu0 0.0
          %690 = vmatpush1.msra.mxu0 0.0
          %691 = vmatprep.subr.mxu0 0.0
          %692 = vmatpush1.msra.mxu0 0.0
          %693 = vmatprep.subr.mxu0 0.0
          %694 = vmatpush1.msra.mxu0 0.0
          %695 = vmatprep.subr.mxu0 0.0
          %696 = vmatpush1.msra.mxu0 0.0
          %697 = vmatprep.subr.mxu0 0.0
          %698 = vmatpush1.msra.mxu0 0.0
          %699 = vmatprep.subr.mxu0 0.0
          %700 = vmatpush1.msra.mxu0 0.0
          %701 = vmatprep.subr.mxu0 0.0
          %702 = vmatpush1.msra.mxu0 0.0
          %703 = vmatprep.subr.mxu0 0.0
          %704 = vmatpush1.msra.mxu0 0.0
          %705 = vmatprep.subr.mxu0 0.0
          %706 = vmatpush1.msra.mxu0 0.0
          %707 = vmatprep.subr.mxu0 0.0
          %708 = vmatpush1.msra.mxu0 0.0
          %709 = vmatprep.subr.mxu0 0.0
          %710 = vmatpush1.msra.mxu0 0.0
          %711 = vmatprep.subr.mxu0 0.0
          %712 = vmatpush1.msra.mxu0 0.0
          %713 = vmatprep.subr.mxu0 0.0
          %714 = vmatpush1.msra.mxu0 %v674
          %715 = vmatprep.subr.mxu0 0.0
          %716 = vmatpush1.msra.mxu0 %v673
          %717 = vmatprep.subr.mxu0 0.0
          %718 = vmatpush1.msra.mxu0 %v672
          %719 = vmatprep.subr.mxu0 0.0
          %720 = vmatpush1.msra.mxu0 %v671
          %721 = vmatprep.subr.mxu0 0.0
          %722 = vmatpush2.msra.mxu0 0.0
          %723 = vmatprep.subr.mxu0 0.0
          %724 = vmatpush2.msra.mxu0 0.0
          %725 = vmatprep.subr.mxu0 0.0
          %726 = vmatpush2.msra.mxu0 0.0
          %727 = vmatprep.subr.mxu0 0.0
          %728 = vmatpush2.msra.mxu0 0.0
          %729 = vmatprep.subr.mxu0 0.0
          %730 = vmatpush2.msra.mxu0 0.0
          %731 = vmatprep.subr.mxu0 0.0
          %732 = vmatpush2.msra.mxu0 0.0
          %733 = vmatprep.subr.mxu0 0.0
          %734 = vmatpush2.msra.mxu0 0.0
          %735 = vmatprep.subr.mxu0 0.0
          %736 = vmatpush2.msra.mxu0 0.0
          %737 = vmatprep.subr.mxu0 0.0
          %738 = vmatpush2.msra.mxu0 0.0
          %739 = vmatprep.subr.mxu0 0.0
          %740 = vmatpush2.msra.mxu0 0.0
          %741 = vmatprep.subr.mxu0 0.0
          %742 = vmatpush2.msra.mxu0 0.0
          %743 = vmatprep.subr.mxu0 0.0
          %744 = vmatpush2.msra.mxu0 0.0
          %745 = vmatprep.subr.mxu0 0.0
          %746 = vmatpush2.msra.mxu0 0.0
          %747 = vmatprep.subr.mxu0 0.0
          %748 = vmatpush2.msra.mxu0 0.0
          %749 = vmatprep.subr.mxu0 0.0
          %750 = vmatpush2.msra.mxu0 0.0
          %751 = vmatprep.subr.mxu0 0.0
          %752 = vmatpush2.msra.mxu0 0.0
          %753 = vmatprep.mubr.f32.mxu0 0.0
          %754 = vmatmul.mubr.f32.gmra.mxu0 %v684
          %v755 = vpop.f32.mrf.mxu0
          %v756 = vadd.f32 %v680, %v755
          %v757 = vpop.f32.mrf.mxu0
          %758 = vmatprep.mubr.f32.mxu0 0.0
          %759 = vmatmul.mubr.f32.gmra.mxu0 %v687
          %v760 = vpop.f32.mrf.mxu0
          %v761 = vadd.f32 %v680, %v760
          %v762 = vpop.f32.mrf.mxu0
          %763 = vdwg.mxu0
          %v764 = vld [vmem:[%s570] sm:$0xff]
          %v765 = vld [vmem:[%s570 + $0x8] sm:$0xff]
          %v766 = vld [vmem:[#allocation14] sm:$0xff]
          %v767 = vld [vmem:[#allocation14 + $0x8] sm:$0xff]
          %v768 = vld [vmem:[#allocation14 + $0x10] sm:$0xff]
          %v769 = vld [vmem:[#allocation14 + $0x18] sm:$0xff]
          %v770 = vld [vmem:[%s6] sm:$0x1]
          %v772 = vlaneseq
          %v773 = vshrl.u32 %v772, 7
          %v774 = vsub.s32 0, %v773
          %v775 = vrot.slane %v770, %v774
          %v778 = vsel %vm682, %v764, 0
          %v781 = vsel %vm682, %v765, 0
          %783 = vmatprep.subr.mxu0 0.0
          %784 = vmatpush1.msra.mxu0 0.0
          %785 = vmatprep.subr.mxu0 0.0
          %786 = vmatpush1.msra.mxu0 0.0
          %787 = vmatprep.subr.mxu0 0.0
          %788 = vmatpush1.msra.mxu0 0.0
          %789 = vmatprep.subr.mxu0 0.0
          %790 = vmatpush1.msra.mxu0 0.0
          %791 = vmatprep.subr.mxu0 0.0
          %792 = vmatpush1.msra.mxu0 0.0
          %793 = vmatprep.subr.mxu0 0.0
          %794 = vmatpush1.msra.mxu0 0.0
          %795 = vmatprep.subr.mxu0 0.0
          %796 = vmatpush1.msra.mxu0 0.0
          %797 = vmatprep.subr.mxu0 0.0
          %798 = vmatpush1.msra.mxu0 0.0
          %799 = vmatprep.subr.mxu0 0.0
          %800 = vmatpush1.msra.mxu0 0.0
          %801 = vmatprep.subr.mxu0 0.0
          %802 = vmatpush1.msra.mxu0 0.0
          %803 = vmatprep.subr.mxu0 0.0
          %804 = vmatpush1.msra.mxu0 0.0
          %805 = vmatprep.subr.mxu0 0.0
          %806 = vmatpush1.msra.mxu0 0.0
          %807 = vmatprep.subr.mxu0 0.0
          %808 = vmatpush1.msra.mxu0 %v769
          %809 = vmatprep.subr.mxu0 0.0
          %810 = vmatpush1.msra.mxu0 %v768
          %811 = vmatprep.subr.mxu0 0.0
          %812 = vmatpush1.msra.mxu0 %v767
          %813 = vmatprep.subr.mxu0 0.0
          %814 = vmatpush1.msra.mxu0 %v766
          %815 = vmatprep.subr.mxu0 0.0
          %816 = vmatpush2.msra.mxu0 0.0
          %817 = vmatprep.subr.mxu0 0.0
          %818 = vmatpush2.msra.mxu0 0.0
          %819 = vmatprep.subr.mxu0 0.0
          %820 = vmatpush2.msra.mxu0 0.0
          %821 = vmatprep.subr.mxu0 0.0
          %822 = vmatpush2.msra.mxu0 0.0
          %823 = vmatprep.subr.mxu0 0.0
          %824 = vmatpush2.msra.mxu0 0.0
          %825 = vmatprep.subr.mxu0 0.0
          %826 = vmatpush2.msra.mxu0 0.0
          %827 = vmatprep.subr.mxu0 0.0
          %828 = vmatpush2.msra.mxu0 0.0
          %829 = vmatprep.subr.mxu0 0.0
          %830 = vmatpush2.msra.mxu0 0.0
          %831 = vmatprep.subr.mxu0 0.0
          %832 = vmatpush2.msra.mxu0 0.0
          %833 = vmatprep.subr.mxu0 0.0
          %834 = vmatpush2.msra.mxu0 0.0
          %835 = vmatprep.subr.mxu0 0.0
          %836 = vmatpush2.msra.mxu0 0.0
          %837 = vmatprep.subr.mxu0 0.0
          %838 = vmatpush2.msra.mxu0 0.0
          %839 = vmatprep.subr.mxu0 0.0
          %840 = vmatpush2.msra.mxu0 0.0
          %841 = vmatprep.subr.mxu0 0.0
          %842 = vmatpush2.msra.mxu0 0.0
          %843 = vmatprep.subr.mxu0 0.0
          %844 = vmatpush2.msra.mxu0 0.0
          %845 = vmatprep.subr.mxu0 0.0
          %846 = vmatpush2.msra.mxu0 0.0
          %847 = vmatprep.mubr.f32.mxu0 0.0
          %848 = vmatmul.mubr.f32.gmra.mxu0 %v778
          %v849 = vpop.f32.mrf.mxu0
          %v850 = vadd.f32 %v775, %v849
          %v851 = vpop.f32.mrf.mxu0
          %852 = vmatprep.mubr.f32.mxu0 0.0
          %853 = vmatmul.mubr.f32.gmra.mxu0 %v781
          %v854 = vpop.f32.mrf.mxu0
          %v855 = vadd.f32 %v775, %v854
          %v856 = vpop.f32.mrf.mxu0
          %857 = vdwg.mxu0
          %858 = vst.msk [vmem:[%s657] sm:$0xff] %vm682, %v756
          %859 = vst.msk [vmem:[%s657 + $0x8] sm:$0xff] %vm682, %v761
          %860 = vst.msk [vmem:[%s664] sm:$0xff] %vm682, %v850
          %861 = vst.msk [vmem:[%s664 + $0x8] sm:$0xff] %vm682, %v855
          %vm862 = vcmask 64512
          %863 = vst.msk [vmem:[#allocation2] sm:$0xff] %vm862, %v756
          %864 = vst.msk [vmem:[#allocation2 + $0x8] sm:$0xff] %vm862, %v761
          %865 = vst.msk [vmem:[#allocation3] sm:$0xff] %vm862, %v850
          %866 = vst.msk [vmem:[#allocation3 + $0x8] sm:$0xff] %vm862, %v855
          %869 = vrot.lane.b32.xlu0 %v756, 120
          %v870 = vpop.permute.xlu0 %869
          %871 = vrot.lane.b32.xlu0 %v761, 120
          %v872 = vpop.permute.xlu0 %871
          %s875 = scalar_lea.vmem [#allocation2], 16
          %876 = vst.msk [vmem:[%s875] sm:$0xff] %vm862, %v870
          %877 = vst.msk [vmem:[%s875 + $0x8] sm:$0xff] %vm862, %v872
          %880 = vrot.lane.b32.xlu0 %v850, 120
          %v881 = vpop.permute.xlu0 %880
          %882 = vrot.lane.b32.xlu0 %v855, 120
          %v883 = vpop.permute.xlu0 %882
          %s886 = scalar_lea.vmem [#allocation3], 16
          %887 = vst.msk [vmem:[%s886] sm:$0xff] %vm862, %v881
          %888 = vst.msk [vmem:[%s886 + $0x8] sm:$0xff] %vm862, %v883
          %889 = vrot.lane.b32.xlu0 %v756, 112
          %v890 = vpop.permute.xlu0 %889
          %891 = vrot.lane.b32.xlu0 %v761, 112
          %v892 = vpop.permute.xlu0 %891
          %s895 = scalar_lea.vmem [#allocation2], 32
          %896 = vst.msk [vmem:[%s895] sm:$0xff] %vm862, %v890
          %897 = vst.msk [vmem:[%s895 + $0x8] sm:$0xff] %vm862, %v892
          %898 = vrot.lane.b32.xlu0 %v850, 112
          %v899 = vpop.permute.xlu0 %898
          %900 = vrot.lane.b32.xlu0 %v855, 112
          %v901 = vpop.permute.xlu0 %900
          %s904 = scalar_lea.vmem [#allocation3], 32
          %905 = vst.msk [vmem:[%s904] sm:$0xff] %vm862, %v899
          %906 = vst.msk [vmem:[%s904 + $0x8] sm:$0xff] %vm862, %v901
          %907 = vrot.lane.b32.xlu0 %v756, 104
          %v908 = vpop.permute.xlu0 %907
          %909 = vrot.lane.b32.xlu0 %v761, 104
          %v910 = vpop.permute.xlu0 %909
          %s913 = scalar_lea.vmem [#allocation2], 48
          %914 = vst.msk [vmem:[%s913] sm:$0xff] %vm862, %v908
          %915 = vst.msk [vmem:[%s913 + $0x8] sm:$0xff] %vm862, %v910
          %916 = vrot.lane.b32.xlu0 %v850, 104
          %v917 = vpop.permute.xlu0 %916
          %918 = vrot.lane.b32.xlu0 %v855, 104
          %v919 = vpop.permute.xlu0 %918
          %s922 = scalar_lea.vmem [#allocation3], 48
          %923 = vst.msk [vmem:[%s922] sm:$0xff] %vm862, %v917
          %924 = vst.msk [vmem:[%s922 + $0x8] sm:$0xff] %vm862, %v919
        $region96: #{tpu_custom_call.1} parent=63 // pred_fallthru
          _
        %v925 = vld [vmem:[%s579] sm:$0xff]
        %v926 = vld [vmem:[#allocation15] sm:$0xff]
        %v927 = vld [vmem:[#allocation15 + $0x8] sm:$0xff]
        %v928 = vld [vmem:[#allocation15 + $0x10] sm:$0xff]
        %v929 = vld [vmem:[#allocation15 + $0x18] sm:$0xff]
        %v930 = vld [vmem:[%s8] sm:$0x1]
        %v932 = vlaneseq
        %v933 = vshrl.u32 %v932, 7
        %v934 = vsub.s32 0, %v933
        %v935 = vrot.slane %v930, %v934
        %vm937 = vcmask 261120
        %v939 = vsel %vm937, %v925, 0
        %941 = vmatprep.subr.mxu0 0.0
        %942 = vmatpush1.msra.mxu0 0.0
        %943 = vmatprep.subr.mxu0 0.0
        %944 = vmatpush1.msra.mxu0 0.0
        %945 = vmatprep.subr.mxu0 0.0
        %946 = vmatpush1.msra.mxu0 0.0
        %947 = vmatprep.subr.mxu0 0.0
        %948 = vmatpush1.msra.mxu0 0.0
        %949 = vmatprep.subr.mxu0 0.0
        %950 = vmatpush1.msra.mxu0 0.0
        %951 = vmatprep.subr.mxu0 0.0
        %952 = vmatpush1.msra.mxu0 0.0
        %953 = vmatprep.subr.mxu0 0.0
        %954 = vmatpush1.msra.mxu0 0.0
        %955 = vmatprep.subr.mxu0 0.0
        %956 = vmatpush1.msra.mxu0 0.0
        %957 = vmatprep.subr.mxu0 0.0
        %958 = vmatpush1.msra.mxu0 0.0
        %959 = vmatprep.subr.mxu0 0.0
        %960 = vmatpush1.msra.mxu0 0.0
        %961 = vmatprep.subr.mxu0 0.0
        %962 = vmatpush1.msra.mxu0 0.0
        %963 = vmatprep.subr.mxu0 0.0
        %964 = vmatpush1.msra.mxu0 0.0
        %965 = vmatprep.subr.mxu0 0.0
        %966 = vmatpush1.msra.mxu0 %v929
        %967 = vmatprep.subr.mxu0 0.0
        %968 = vmatpush1.msra.mxu0 %v928
        %969 = vmatprep.subr.mxu0 0.0
        %970 = vmatpush1.msra.mxu0 %v927
        %971 = vmatprep.subr.mxu0 0.0
        %972 = vmatpush1.msra.mxu0 %v926
        %973 = vmatprep.subr.mxu0 0.0
        %974 = vmatpush2.msra.mxu0 0.0
        %975 = vmatprep.subr.mxu0 0.0
        %976 = vmatpush2.msra.mxu0 0.0
        %977 = vmatprep.subr.mxu0 0.0
        %978 = vmatpush2.msra.mxu0 0.0
        %979 = vmatprep.subr.mxu0 0.0
        %980 = vmatpush2.msra.mxu0 0.0
        %981 = vmatprep.subr.mxu0 0.0
        %982 = vmatpush2.msra.mxu0 0.0
        %983 = vmatprep.subr.mxu0 0.0
        %984 = vmatpush2.msra.mxu0 0.0
        %985 = vmatprep.subr.mxu0 0.0
        %986 = vmatpush2.msra.mxu0 0.0
        %987 = vmatprep.subr.mxu0 0.0
        %988 = vmatpush2.msra.mxu0 0.0
        %989 = vmatprep.subr.mxu0 0.0
        %990 = vmatpush2.msra.mxu0 0.0
        %991 = vmatprep.subr.mxu0 0.0
        %992 = vmatpush2.msra.mxu0 0.0
        %993 = vmatprep.subr.mxu0 0.0
        %994 = vmatpush2.msra.mxu0 0.0
        %995 = vmatprep.subr.mxu0 0.0
        %996 = vmatpush2.msra.mxu0 0.0
        %997 = vmatprep.subr.mxu0 0.0
        %998 = vmatpush2.msra.mxu0 0.0
        %999 = vmatprep.subr.mxu0 0.0
        %1000 = vmatpush2.msra.mxu0 0.0
        %1001 = vmatprep.subr.mxu0 0.0
        %1002 = vmatpush2.msra.mxu0 0.0
        %1003 = vmatprep.subr.mxu0 0.0
        %1004 = vmatpush2.msra.mxu0 0.0
        %1005 = vmatprep.mubr.f32.mxu0 0.0
        %1006 = vmatmul.mubr.f32.gmra.mxu0 %v939
        %v1007 = vpop.f32.mrf.mxu0
        %v1008 = vadd.f32 %v935, %v1007
        %v1009 = vpop.f32.mrf.mxu0
        %1010 = vdwg.mxu0
        %vm1011 = vcmask 64512
        %1012 = vst.msk [vmem:[#allocation4] sm:$0xff] %vm1011, %v1008
        %1014 = vrot.lane.b32.xlu0 %v1008, 120
        %v1015 = vpop.permute.xlu0 %1014
        %s1017 = scalar_lea.vmem [#allocation4], 8
        %1018 = vst.msk [vmem:[%s1017] sm:$0xff] %vm1011, %v1015
        %1019 = vrot.lane.b32.xlu0 %v1008, 112
        %v1020 = vpop.permute.xlu0 %1019
        %s1022 = scalar_lea.vmem [#allocation4], 16
        %1023 = vst.msk [vmem:[%s1022] sm:$0xff] %vm1011, %v1020
        %1024 = vrot.lane.b32.xlu0 %v1008, 104
        %v1025 = vpop.permute.xlu0 %1024
        %s1027 = scalar_lea.vmem [#allocation4], 24
        %1028 = vst.msk [vmem:[%s1027] sm:$0xff] %vm1011, %v1025
        %v1029 = vld [vmem:[#allocation4] sm:$0xff]
        %v1030 = vld [vmem:[#allocation4 + $0x8] sm:$0xff]
        %v1031 = vld [vmem:[#allocation4 + $0x10] sm:$0xff]
        %v1032 = vld [vmem:[#allocation4 + $0x18] sm:$0xff]
        %v1033 = vld [vmem:[#allocation2] sm:$0xff]
        %v1034 = vld [vmem:[#allocation2 + $0x8] sm:$0xff]
        %v1035 = vld [vmem:[#allocation2 + $0x10] sm:$0xff]
        %v1036 = vld [vmem:[#allocation2 + $0x18] sm:$0xff]
        %v1037 = vld [vmem:[#allocation2 + $0x20] sm:$0xff]
        %v1038 = vld [vmem:[#allocation2 + $0x28] sm:$0xff]
        %v1039 = vld [vmem:[#allocation2 + $0x30] sm:$0xff]
        %v1040 = vld [vmem:[#allocation2 + $0x38] sm:$0xff]
        %v1042 = vsel %vm1011, %v1029, 0
        %v1045 = vsel %vm1011, %v1033, 0
        %v1048 = vsel %vm1011, %v1034, 0
        %1050 = vmatprep.subr.mxu0 0.0
        %1051 = vmatpush1.xpose.msra.mxu0 0.0
        %1052 = vmatprep.subr.mxu0 0.0
        %1053 = vmatpush1.xpose.msra.mxu0 0.0
        %1054 = vmatprep.subr.mxu0 0.0
        %1055 = vmatpush1.xpose.msra.mxu0 0.0
        %1056 = vmatprep.subr.mxu0 0.0
        %1057 = vmatpush1.xpose.msra.mxu0 0.0
        %1058 = vmatprep.subr.mxu0 0.0
        %1059 = vmatpush1.xpose.msra.mxu0 0.0
        %1060 = vmatprep.subr.mxu0 0.0
        %1061 = vmatpush1.xpose.msra.mxu0 0.0
        %1062 = vmatprep.subr.mxu0 0.0
        %1063 = vmatpush1.xpose.msra.mxu0 0.0
        %1064 = vmatprep.subr.mxu0 0.0
        %1065 = vmatpush1.xpose.msra.mxu0 0.0
        %1066 = vmatprep.subr.mxu0 0.0
        %1067 = vmatpush1.xpose.msra.mxu0 0.0
        %1068 = vmatprep.subr.mxu0 0.0
        %1069 = vmatpush1.xpose.msra.mxu0 0.0
        %1070 = vmatprep.subr.mxu0 0.0
        %1071 = vmatpush1.xpose.msra.mxu0 0.0
        %1072 = vmatprep.subr.mxu0 0.0
        %1073 = vmatpush1.xpose.msra.mxu0 0.0
        %1074 = vmatprep.subr.mxu0 0.0
        %1075 = vmatpush1.xpose.msra.mxu0 0.0
        %1076 = vmatprep.subr.mxu0 0.0
        %1077 = vmatpush1.xpose.msra.mxu0 0.0
        %1078 = vmatprep.subr.mxu0 0.0
        %1079 = vmatpush1.xpose.msra.mxu0 %v1048
        %1080 = vmatprep.subr.mxu0 0.0
        %1081 = vmatpush1.xpose.msra.mxu0 %v1045
        %1082 = vmatprep.subr.mxu0 0.0
        %1083 = vmatpush2.xpose.msra.mxu0 0.0
        %1084 = vmatprep.subr.mxu0 0.0
        %1085 = vmatpush2.xpose.msra.mxu0 0.0
        %1086 = vmatprep.subr.mxu0 0.0
        %1087 = vmatpush2.xpose.msra.mxu0 0.0
        %1088 = vmatprep.subr.mxu0 0.0
        %1089 = vmatpush2.xpose.msra.mxu0 0.0
        %1090 = vmatprep.subr.mxu0 0.0
        %1091 = vmatpush2.xpose.msra.mxu0 0.0
        %1092 = vmatprep.subr.mxu0 0.0
        %1093 = vmatpush2.xpose.msra.mxu0 0.0
        %1094 = vmatprep.subr.mxu0 0.0
        %1095 = vmatpush2.xpose.msra.mxu0 0.0
        %1096 = vmatprep.subr.mxu0 0.0
        %1097 = vmatpush2.xpose.msra.mxu0 0.0
        %1098 = vmatprep.subr.mxu0 0.0
        %1099 = vmatpush2.xpose.msra.mxu0 0.0
        %1100 = vmatprep.subr.mxu0 0.0
        %1101 = vmatpush2.xpose.msra.mxu0 0.0
        %1102 = vmatprep.subr.mxu0 0.0
        %1103 = vmatpush2.xpose.msra.mxu0 0.0
        %1104 = vmatprep.subr.mxu0 0.0
        %1105 = vmatpush2.xpose.msra.mxu0 0.0
        %1106 = vmatprep.subr.mxu0 0.0
        %1107 = vmatpush2.xpose.msra.mxu0 0.0
        %1108 = vmatprep.subr.mxu0 0.0
        %1109 = vmatpush2.xpose.msra.mxu0 0.0
        %1110 = vmatprep.subr.mxu0 0.0
        %1111 = vmatpush2.xpose.msra.mxu0 0.0
        %1112 = vmatprep.subr.mxu0 0.0
        %1113 = vmatpush2.xpose.msra.mxu0 0.0
        %1114 = vmatprep.mubr.f32.mxu0 0.0
        %1115 = vmatmul.mubr.f32.gmra.mxu0 %v1042
        %v1116 = vpop.f32.mrf.mxu0
        %v1117 = vadd.f32 0.0, %v1116
        %v1118 = vpop.f32.mrf.mxu0
        %1119 = vdwg.mxu0
        %v1121 = vsel %vm1011, %v1030, 0
        %v1124 = vsel %vm1011, %v1035, 0
        %v1127 = vsel %vm1011, %v1036, 0
        %1129 = vmatprep.subr.mxu0 0.0
        %1130 = vmatpush1.xpose.msra.mxu0 0.0
        %1131 = vmatprep.subr.mxu0 0.0
        %1132 = vmatpush1.xpose.msra.mxu0 0.0
        %1133 = vmatprep.subr.mxu0 0.0
        %1134 = vmatpush1.xpose.msra.mxu0 0.0
        %1135 = vmatprep.subr.mxu0 0.0
        %1136 = vmatpush1.xpose.msra.mxu0 0.0
        %1137 = vmatprep.subr.mxu0 0.0
        %1138 = vmatpush1.xpose.msra.mxu0 0.0
        %1139 = vmatprep.subr.mxu0 0.0
        %1140 = vmatpush1.xpose.msra.mxu0 0.0
        %1141 = vmatprep.subr.mxu0 0.0
        %1142 = vmatpush1.xpose.msra.mxu0 0.0
        %1143 = vmatprep.subr.mxu0 0.0
        %1144 = vmatpush1.xpose.msra.mxu0 0.0
        %1145 = vmatprep.subr.mxu0 0.0
        %1146 = vmatpush1.xpose.msra.mxu0 0.0
        %1147 = vmatprep.subr.mxu0 0.0
        %1148 = vmatpush1.xpose.msra.mxu0 0.0
        %1149 = vmatprep.subr.mxu0 0.0
        %1150 = vmatpush1.xpose.msra.mxu0 0.0
        %1151 = vmatprep.subr.mxu0 0.0
        %1152 = vmatpush1.xpose.msra.mxu0 0.0
        %1153 = vmatprep.subr.mxu0 0.0
        %1154 = vmatpush1.xpose.msra.mxu0 0.0
        %1155 = vmatprep.subr.mxu0 0.0
        %1156 = vmatpush1.xpose.msra.mxu0 0.0
        %1157 = vmatprep.subr.mxu0 0.0
        %1158 = vmatpush1.xpose.msra.mxu0 %v1127
        %1159 = vmatprep.subr.mxu0 0.0
        %1160 = vmatpush1.xpose.msra.mxu0 %v1124
        %1161 = vmatprep.subr.mxu0 0.0
        %1162 = vmatpush2.xpose.msra.mxu0 0.0
        %1163 = vmatprep.subr.mxu0 0.0
        %1164 = vmatpush2.xpose.msra.mxu0 0.0
        %1165 = vmatprep.subr.mxu0 0.0
        %1166 = vmatpush2.xpose.msra.mxu0 0.0
        %1167 = vmatprep.subr.mxu0 0.0
        %1168 = vmatpush2.xpose.msra.mxu0 0.0
        %1169 = vmatprep.subr.mxu0 0.0
        %1170 = vmatpush2.xpose.msra.mxu0 0.0
        %1171 = vmatprep.subr.mxu0 0.0
        %1172 = vmatpush2.xpose.msra.mxu0 0.0
        %1173 = vmatprep.subr.mxu0 0.0
        %1174 = vmatpush2.xpose.msra.mxu0 0.0
        %1175 = vmatprep.subr.mxu0 0.0
        %1176 = vmatpush2.xpose.msra.mxu0 0.0
        %1177 = vmatprep.subr.mxu0 0.0
        %1178 = vmatpush2.xpose.msra.mxu0 0.0
        %1179 = vmatprep.subr.mxu0 0.0
        %1180 = vmatpush2.xpose.msra.mxu0 0.0
        %1181 = vmatprep.subr.mxu0 0.0
        %1182 = vmatpush2.xpose.msra.mxu0 0.0
        %1183 = vmatprep.subr.mxu0 0.0
        %1184 = vmatpush2.xpose.msra.mxu0 0.0
        %1185 = vmatprep.subr.mxu0 0.0
        %1186 = vmatpush2.xpose.msra.mxu0 0.0
        %1187 = vmatprep.subr.mxu0 0.0
        %1188 = vmatpush2.xpose.msra.mxu0 0.0
        %1189 = vmatprep.subr.mxu0 0.0
        %1190 = vmatpush2.xpose.msra.mxu0 0.0
        %1191 = vmatprep.subr.mxu0 0.0
        %1192 = vmatpush2.xpose.msra.mxu0 0.0
        %1193 = vmatprep.mubr.f32.mxu0 0.0
        %1194 = vmatmul.mubr.f32.gmra.mxu0 %v1121
        %v1195 = vpop.f32.mrf.mxu0
        %v1196 = vadd.f32 0.0, %v1195
        %v1197 = vpop.f32.mrf.mxu0
        %1198 = vdwg.mxu0
        %v1200 = vsel %vm1011, %v1031, 0
        %v1203 = vsel %vm1011, %v1037, 0
        %v1206 = vsel %vm1011, %v1038, 0
        %1208 = vmatprep.subr.mxu0 0.0
        %1209 = vmatpush1.xpose.msra.mxu0 0.0
        %1210 = vmatprep.subr.mxu0 0.0
        %1211 = vmatpush1.xpose.msra.mxu0 0.0
        %1212 = vmatprep.subr.mxu0 0.0
        %1213 = vmatpush1.xpose.msra.mxu0 0.0
        %1214 = vmatprep.subr.mxu0 0.0
        %1215 = vmatpush1.xpose.msra.mxu0 0.0
        %1216 = vmatprep.subr.mxu0 0.0
        %1217 = vmatpush1.xpose.msra.mxu0 0.0
        %1218 = vmatprep.subr.mxu0 0.0
        %1219 = vmatpush1.xpose.msra.mxu0 0.0
        %1220 = vmatprep.subr.mxu0 0.0
        %1221 = vmatpush1.xpose.msra.mxu0 0.0
        %1222 = vmatprep.subr.mxu0 0.0
        %1223 = vmatpush1.xpose.msra.mxu0 0.0
        %1224 = vmatprep.subr.mxu0 0.0
        %1225 = vmatpush1.xpose.msra.mxu0 0.0
        %1226 = vmatprep.subr.mxu0 0.0
        %1227 = vmatpush1.xpose.msra.mxu0 0.0
        %1228 = vmatprep.subr.mxu0 0.0
        %1229 = vmatpush1.xpose.msra.mxu0 0.0
        %1230 = vmatprep.subr.mxu0 0.0
        %1231 = vmatpush1.xpose.msra.mxu0 0.0
        %1232 = vmatprep.subr.mxu0 0.0
        %1233 = vmatpush1.xpose.msra.mxu0 0.0
        %1234 = vmatprep.subr.mxu0 0.0
        %1235 = vmatpush1.xpose.msra.mxu0 0.0
        %1236 = vmatprep.subr.mxu0 0.0
        %1237 = vmatpush1.xpose.msra.mxu0 %v1206
        %1238 = vmatprep.subr.mxu0 0.0
        %1239 = vmatpush1.xpose.msra.mxu0 %v1203
        %1240 = vmatprep.subr.mxu0 0.0
        %1241 = vmatpush2.xpose.msra.mxu0 0.0
        %1242 = vmatprep.subr.mxu0 0.0
        %1243 = vmatpush2.xpose.msra.mxu0 0.0
        %1244 = vmatprep.subr.mxu0 0.0
        %1245 = vmatpush2.xpose.msra.mxu0 0.0
        %1246 = vmatprep.subr.mxu0 0.0
        %1247 = vmatpush2.xpose.msra.mxu0 0.0
        %1248 = vmatprep.subr.mxu0 0.0
        %1249 = vmatpush2.xpose.msra.mxu0 0.0
        %1250 = vmatprep.subr.mxu0 0.0
        %1251 = vmatpush2.xpose.msra.mxu0 0.0
        %1252 = vmatprep.subr.mxu0 0.0
        %1253 = vmatpush2.xpose.msra.mxu0 0.0
        %1254 = vmatprep.subr.mxu0 0.0
        %1255 = vmatpush2.xpose.msra.mxu0 0.0
        %1256 = vmatprep.subr.mxu0 0.0
        %1257 = vmatpush2.xpose.msra.mxu0 0.0
        %1258 = vmatprep.subr.mxu0 0.0
        %1259 = vmatpush2.xpose.msra.mxu0 0.0
        %1260 = vmatprep.subr.mxu0 0.0
        %1261 = vmatpush2.xpose.msra.mxu0 0.0
        %1262 = vmatprep.subr.mxu0 0.0
        %1263 = vmatpush2.xpose.msra.mxu0 0.0
        %1264 = vmatprep.subr.mxu0 0.0
        %1265 = vmatpush2.xpose.msra.mxu0 0.0
        %1266 = vmatprep.subr.mxu0 0.0
        %1267 = vmatpush2.xpose.msra.mxu0 0.0
        %1268 = vmatprep.subr.mxu0 0.0
        %1269 = vmatpush2.xpose.msra.mxu0 0.0
        %1270 = vmatprep.subr.mxu0 0.0
        %1271 = vmatpush2.xpose.msra.mxu0 0.0
        %1272 = vmatprep.mubr.f32.mxu0 0.0
        %1273 = vmatmul.mubr.f32.gmra.mxu0 %v1200
        %v1274 = vpop.f32.mrf.mxu0
        %v1275 = vadd.f32 0.0, %v1274
        %v1276 = vpop.f32.mrf.mxu0
        %1277 = vdwg.mxu0
        %v1279 = vsel %vm1011, %v1032, 0
        %v1282 = vsel %vm1011, %v1039, 0
        %v1285 = vsel %vm1011, %v1040, 0
        %1287 = vmatprep.subr.mxu0 0.0
        %1288 = vmatpush1.xpose.msra.mxu0 0.0
        %1289 = vmatprep.subr.mxu0 0.0
        %1290 = vmatpush1.xpose.msra.mxu0 0.0
        %1291 = vmatprep.subr.mxu0 0.0
        %1292 = vmatpush1.xpose.msra.mxu0 0.0
        %1293 = vmatprep.subr.mxu0 0.0
        %1294 = vmatpush1.xpose.msra.mxu0 0.0
        %1295 = vmatprep.subr.mxu0 0.0
        %1296 = vmatpush1.xpose.msra.mxu0 0.0
        %1297 = vmatprep.subr.mxu0 0.0
        %1298 = vmatpush1.xpose.msra.mxu0 0.0
        %1299 = vmatprep.subr.mxu0 0.0
        %1300 = vmatpush1.xpose.msra.mxu0 0.0
        %1301 = vmatprep.subr.mxu0 0.0
        %1302 = vmatpush1.xpose.msra.mxu0 0.0
        %1303 = vmatprep.subr.mxu0 0.0
        %1304 = vmatpush1.xpose.msra.mxu0 0.0
        %1305 = vmatprep.subr.mxu0 0.0
        %1306 = vmatpush1.xpose.msra.mxu0 0.0
        %1307 = vmatprep.subr.mxu0 0.0
        %1308 = vmatpush1.xpose.msra.mxu0 0.0
        %1309 = vmatprep.subr.mxu0 0.0
        %1310 = vmatpush1.xpose.msra.mxu0 0.0
        %1311 = vmatprep.subr.mxu0 0.0
        %1312 = vmatpush1.xpose.msra.mxu0 0.0
        %1313 = vmatprep.subr.mxu0 0.0
        %1314 = vmatpush1.xpose.msra.mxu0 0.0
        %1315 = vmatprep.subr.mxu0 0.0
        %1316 = vmatpush1.xpose.msra.mxu0 %v1285
        %1317 = vmatprep.subr.mxu0 0.0
        %1318 = vmatpush1.xpose.msra.mxu0 %v1282
        %1319 = vmatprep.subr.mxu0 0.0
        %1320 = vmatpush2.xpose.msra.mxu0 0.0
        %1321 = vmatprep.subr.mxu0 0.0
        %1322 = vmatpush2.xpose.msra.mxu0 0.0
        %1323 = vmatprep.subr.mxu0 0.0
        %1324 = vmatpush2.xpose.msra.mxu0 0.0
        %1325 = vmatprep.subr.mxu0 0.0
        %1326 = vmatpush2.xpose.msra.mxu0 0.0
        %1327 = vmatprep.subr.mxu0 0.0
        %1328 = vmatpush2.xpose.msra.mxu0 0.0
        %1329 = vmatprep.subr.mxu0 0.0
        %1330 = vmatpush2.xpose.msra.mxu0 0.0
        %1331 = vmatprep.subr.mxu0 0.0
        %1332 = vmatpush2.xpose.msra.mxu0 0.0
        %1333 = vmatprep.subr.mxu0 0.0
        %1334 = vmatpush2.xpose.msra.mxu0 0.0
        %1335 = vmatprep.subr.mxu0 0.0
        %1336 = vmatpush2.xpose.msra.mxu0 0.0
        %1337 = vmatprep.subr.mxu0 0.0
        %1338 = vmatpush2.xpose.msra.mxu0 0.0
        %1339 = vmatprep.subr.mxu0 0.0
        %1340 = vmatpush2.xpose.msra.mxu0 0.0
        %1341 = vmatprep.subr.mxu0 0.0
        %1342 = vmatpush2.xpose.msra.mxu0 0.0
        %1343 = vmatprep.subr.mxu0 0.0
        %1344 = vmatpush2.xpose.msra.mxu0 0.0
        %1345 = vmatprep.subr.mxu0 0.0
        %1346 = vmatpush2.xpose.msra.mxu0 0.0
        %1347 = vmatprep.subr.mxu0 0.0
        %1348 = vmatpush2.xpose.msra.mxu0 0.0
        %1349 = vmatprep.subr.mxu0 0.0
        %1350 = vmatpush2.xpose.msra.mxu0 0.0
        %1351 = vmatprep.mubr.f32.mxu0 0.0
        %1352 = vmatmul.mubr.f32.gmra.mxu0 %v1279
        %v1353 = vpop.f32.mrf.mxu0
        %v1354 = vadd.f32 0.0, %v1353
        %v1355 = vpop.f32.mrf.mxu0
        %1356 = vdwg.mxu0
        %vm1357 = vcmask 130048
        %v1358 = vsel %vm1357, %v1117, -inf
        %1359 = vmax.xlane.f32.xlu0 %v1358
        %v1360 = vpop.xlane.xlu0 %1359
        %v1361 = vsel %vm1357, %v1196, -inf
        %1362 = vmax.xlane.f32.xlu0 %v1361
        %v1363 = vpop.xlane.xlu0 %1362
        %v1364 = vsel %vm1357, %v1275, -inf
        %1365 = vmax.xlane.f32.xlu0 %v1364
        %v1366 = vpop.xlane.xlu0 %1365
        %v1367 = vsel %vm1357, %v1354, -inf
        %1368 = vmax.xlane.f32.xlu0 %v1367
        %v1369 = vpop.xlane.xlu0 %1368
        %v1370 = vsub.f32 %v1117, %v1360
        %v1371 = vsub.f32 %v1196, %v1363
        %v1372 = vsub.f32 %v1275, %v1366
        %v1373 = vsub.f32 %v1354, %v1369
        %v1374 = vmul.f32 %v1370, 1.442695
        %v1375 = vpow.pop %v1374
        %v1376 = vmul.f32 %v1371, 1.442695
        %v1377 = vpow.pop %v1376
        %v1378 = vmul.f32 %v1372, 1.442695
        %v1379 = vpow.pop %v1378
        %v1380 = vmul.f32 %v1373, 1.442695
        %v1381 = vpow.pop %v1380
        %v1382 = vsel %vm1357, %v1375, 0.0
        %1383 = vadd.xlane.f32.xlu0 %v1382
        %v1384 = vpop.xlane.xlu0 %1383
        %v1385 = vsel %vm1357, %v1377, 0.0
        %1386 = vadd.xlane.f32.xlu0 %v1385
        %v1387 = vpop.xlane.xlu0 %1386
        %v1388 = vsel %vm1357, %v1379, 0.0
        %1389 = vadd.xlane.f32.xlu0 %v1388
        %v1390 = vpop.xlane.xlu0 %1389
        %v1391 = vsel %vm1357, %v1381, 0.0
        %1392 = vadd.xlane.f32.xlu0 %v1391
        %v1393 = vpop.xlane.xlu0 %1392
        %v1394 = vrcp.pop %v1384
        %v1395 = vrcp.pop %v1387
        %v1396 = vrcp.pop %v1390
        %v1397 = vrcp.pop %v1393
        %v1398 = vmul.f32 %v1375, %v1394
        %v1399 = vmul.f32 %v1377, %v1395
        %v1400 = vmul.f32 %v1379, %v1396
        %v1401 = vmul.f32 %v1381, %v1397
        %1402 = vst.msk [vmem:[%s650] sm:$0xff] %vm1357, %v1398
        %v1403 = vld [vmem:[#allocation3] sm:$0xff]
        %v1404 = vld [vmem:[#allocation3 + $0x8] sm:$0xff]
        %v1405 = vld [vmem:[#allocation3 + $0x10] sm:$0xff]
        %v1406 = vld [vmem:[#allocation3 + $0x18] sm:$0xff]
        %v1407 = vld [vmem:[#allocation3 + $0x20] sm:$0xff]
        %v1408 = vld [vmem:[#allocation3 + $0x28] sm:$0xff]
        %v1409 = vld [vmem:[#allocation3 + $0x30] sm:$0xff]
        %v1410 = vld [vmem:[#allocation3 + $0x38] sm:$0xff]
        %v1412 = vsel %vm1357, %v1398, 0
        %1414 = vmatprep.subr.mxu0 0.0
        %1415 = vmatpush1.msra.mxu0 0.0
        %1416 = vmatprep.subr.mxu0 0.0
        %1417 = vmatpush1.msra.mxu0 0.0
        %1418 = vmatprep.subr.mxu0 0.0
        %1419 = vmatpush1.msra.mxu0 0.0
        %1420 = vmatprep.subr.mxu0 0.0
        %1421 = vmatpush1.msra.mxu0 0.0
        %1422 = vmatprep.subr.mxu0 0.0
        %1423 = vmatpush1.msra.mxu0 0.0
        %1424 = vmatprep.subr.mxu0 0.0
        %1425 = vmatpush1.msra.mxu0 0.0
        %1426 = vmatprep.subr.mxu0 0.0
        %1427 = vmatpush1.msra.mxu0 0.0
        %1428 = vmatprep.subr.mxu0 0.0
        %1429 = vmatpush1.msra.mxu0 0.0
        %1430 = vmatprep.subr.mxu0 0.0
        %1431 = vmatpush1.msra.mxu0 0.0
        %1432 = vmatprep.subr.mxu0 0.0
        %1433 = vmatpush1.msra.mxu0 0.0
        %1434 = vmatprep.subr.mxu0 0.0
        %1435 = vmatpush1.msra.mxu0 0.0
        %1436 = vmatprep.subr.mxu0 0.0
        %1437 = vmatpush1.msra.mxu0 0.0
        %1438 = vmatprep.subr.mxu0 0.0
        %1439 = vmatpush1.msra.mxu0 0.0
        %1440 = vmatprep.subr.mxu0 0.0
        %1441 = vmatpush1.msra.mxu0 0.0
        %1442 = vmatprep.subr.mxu0 0.0
        %1443 = vmatpush1.msra.mxu0 %v1404
        %1444 = vmatprep.subr.mxu0 0.0
        %1445 = vmatpush1.msra.mxu0 %v1403
        %1446 = vmatprep.subr.mxu0 0.0
        %1447 = vmatpush2.msra.mxu0 0.0
        %1448 = vmatprep.subr.mxu0 0.0
        %1449 = vmatpush2.msra.mxu0 0.0
        %1450 = vmatprep.subr.mxu0 0.0
        %1451 = vmatpush2.msra.mxu0 0.0
        %1452 = vmatprep.subr.mxu0 0.0
        %1453 = vmatpush2.msra.mxu0 0.0
        %1454 = vmatprep.subr.mxu0 0.0
        %1455 = vmatpush2.msra.mxu0 0.0
        %1456 = vmatprep.subr.mxu0 0.0
        %1457 = vmatpush2.msra.mxu0 0.0
        %1458 = vmatprep.subr.mxu0 0.0
        %1459 = vmatpush2.msra.mxu0 0.0
        %1460 = vmatprep.subr.mxu0 0.0
        %1461 = vmatpush2.msra.mxu0 0.0
        %1462 = vmatprep.subr.mxu0 0.0
        %1463 = vmatpush2.msra.mxu0 0.0
        %1464 = vmatprep.subr.mxu0 0.0
        %1465 = vmatpush2.msra.mxu0 0.0
        %1466 = vmatprep.subr.mxu0 0.0
        %1467 = vmatpush2.msra.mxu0 0.0
        %1468 = vmatprep.subr.mxu0 0.0
        %1469 = vmatpush2.msra.mxu0 0.0
        %1470 = vmatprep.subr.mxu0 0.0
        %1471 = vmatpush2.msra.mxu0 0.0
        %1472 = vmatprep.subr.mxu0 0.0
        %1473 = vmatpush2.msra.mxu0 0.0
        %1474 = vmatprep.subr.mxu0 0.0
        %1475 = vmatpush2.msra.mxu0 0.0
        %1476 = vmatprep.subr.mxu0 0.0
        %1477 = vmatpush2.msra.mxu0 0.0
        %1478 = vmatprep.mubr.f32.mxu0 0.0
        %1479 = vmatmul.mubr.f32.gmra.mxu0 %v1412
        %v1480 = vpop.f32.mrf.mxu0
        %v1481 = vadd.f32 0.0, %v1480
        %v1482 = vpop.f32.mrf.mxu0
        %1483 = vdwg.mxu0
        %v1485 = vsel %vm1357, %v1399, 0
        %1487 = vmatprep.subr.mxu0 0.0
        %1488 = vmatpush1.msra.mxu0 0.0
        %1489 = vmatprep.subr.mxu0 0.0
        %1490 = vmatpush1.msra.mxu0 0.0
        %1491 = vmatprep.subr.mxu0 0.0
        %1492 = vmatpush1.msra.mxu0 0.0
        %1493 = vmatprep.subr.mxu0 0.0
        %1494 = vmatpush1.msra.mxu0 0.0
        %1495 = vmatprep.subr.mxu0 0.0
        %1496 = vmatpush1.msra.mxu0 0.0
        %1497 = vmatprep.subr.mxu0 0.0
        %1498 = vmatpush1.msra.mxu0 0.0
        %1499 = vmatprep.subr.mxu0 0.0
        %1500 = vmatpush1.msra.mxu0 0.0
        %1501 = vmatprep.subr.mxu0 0.0
        %1502 = vmatpush1.msra.mxu0 0.0
        %1503 = vmatprep.subr.mxu0 0.0
        %1504 = vmatpush1.msra.mxu0 0.0
        %1505 = vmatprep.subr.mxu0 0.0
        %1506 = vmatpush1.msra.mxu0 0.0
        %1507 = vmatprep.subr.mxu0 0.0
        %1508 = vmatpush1.msra.mxu0 0.0
        %1509 = vmatprep.subr.mxu0 0.0
        %1510 = vmatpush1.msra.mxu0 0.0
        %1511 = vmatprep.subr.mxu0 0.0
        %1512 = vmatpush1.msra.mxu0 0.0
        %1513 = vmatprep.subr.mxu0 0.0
        %1514 = vmatpush1.msra.mxu0 0.0
        %1515 = vmatprep.subr.mxu0 0.0
        %1516 = vmatpush1.msra.mxu0 %v1406
        %1517 = vmatprep.subr.mxu0 0.0
        %1518 = vmatpush1.msra.mxu0 %v1405
        %1519 = vmatprep.subr.mxu0 0.0
        %1520 = vmatpush2.msra.mxu0 0.0
        %1521 = vmatprep.subr.mxu0 0.0
        %1522 = vmatpush2.msra.mxu0 0.0
        %1523 = vmatprep.subr.mxu0 0.0
        %1524 = vmatpush2.msra.mxu0 0.0
        %1525 = vmatprep.subr.mxu0 0.0
        %1526 = vmatpush2.msra.mxu0 0.0
        %1527 = vmatprep.subr.mxu0 0.0
        %1528 = vmatpush2.msra.mxu0 0.0
        %1529 = vmatprep.subr.mxu0 0.0
        %1530 = vmatpush2.msra.mxu0 0.0
        %1531 = vmatprep.subr.mxu0 0.0
        %1532 = vmatpush2.msra.mxu0 0.0
        %1533 = vmatprep.subr.mxu0 0.0
        %1534 = vmatpush2.msra.mxu0 0.0
        %1535 = vmatprep.subr.mxu0 0.0
        %1536 = vmatpush2.msra.mxu0 0.0
        %1537 = vmatprep.subr.mxu0 0.0
        %1538 = vmatpush2.msra.mxu0 0.0
        %1539 = vmatprep.subr.mxu0 0.0
        %1540 = vmatpush2.msra.mxu0 0.0
        %1541 = vmatprep.subr.mxu0 0.0
        %1542 = vmatpush2.msra.mxu0 0.0
        %1543 = vmatprep.subr.mxu0 0.0
        %1544 = vmatpush2.msra.mxu0 0.0
        %1545 = vmatprep.subr.mxu0 0.0
        %1546 = vmatpush2.msra.mxu0 0.0
        %1547 = vmatprep.subr.mxu0 0.0
        %1548 = vmatpush2.msra.mxu0 0.0
        %1549 = vmatprep.subr.mxu0 0.0
        %1550 = vmatpush2.msra.mxu0 0.0
        %1551 = vmatprep.mubr.f32.mxu0 0.0
        %1552 = vmatmul.mubr.f32.gmra.mxu0 %v1485
        %v1553 = vpop.f32.mrf.mxu0
        %v1554 = vadd.f32 0.0, %v1553
        %v1555 = vpop.f32.mrf.mxu0
        %1556 = vdwg.mxu0
        %v1558 = vsel %vm1357, %v1400, 0
        %1560 = vmatprep.subr.mxu0 0.0
        %1561 = vmatpush1.msra.mxu0 0.0
        %1562 = vmatprep.subr.mxu0 0.0
        %1563 = vmatpush1.msra.mxu0 0.0
        %1564 = vmatprep.subr.mxu0 0.0
        %1565 = vmatpush1.msra.mxu0 0.0
        %1566 = vmatprep.subr.mxu0 0.0
        %1567 = vmatpush1.msra.mxu0 0.0
        %1568 = vmatprep.subr.mxu0 0.0
        %1569 = vmatpush1.msra.mxu0 0.0
        %1570 = vmatprep.subr.mxu0 0.0
        %1571 = vmatpush1.msra.mxu0 0.0
        %1572 = vmatprep.subr.mxu0 0.0
        %1573 = vmatpush1.msra.mxu0 0.0
        %1574 = vmatprep.subr.mxu0 0.0
        %1575 = vmatpush1.msra.mxu0 0.0
        %1576 = vmatprep.subr.mxu0 0.0
        %1577 = vmatpush1.msra.mxu0 0.0
        %1578 = vmatprep.subr.mxu0 0.0
        %1579 = vmatpush1.msra.mxu0 0.0
        %1580 = vmatprep.subr.mxu0 0.0
        %1581 = vmatpush1.msra.mxu0 0.0
        %1582 = vmatprep.subr.mxu0 0.0
        %1583 = vmatpush1.msra.mxu0 0.0
        %1584 = vmatprep.subr.mxu0 0.0
        %1585 = vmatpush1.msra.mxu0 0.0
        %1586 = vmatprep.subr.mxu0 0.0
        %1587 = vmatpush1.msra.mxu0 0.0
        %1588 = vmatprep.subr.mxu0 0.0
        %1589 = vmatpush1.msra.mxu0 %v1408
        %1590 = vmatprep.subr.mxu0 0.0
        %1591 = vmatpush1.msra.mxu0 %v1407
        %1592 = vmatprep.subr.mxu0 0.0
        %1593 = vmatpush2.msra.mxu0 0.0
        %1594 = vmatprep.subr.mxu0 0.0
        %1595 = vmatpush2.msra.mxu0 0.0
        %1596 = vmatprep.subr.mxu0 0.0
        %1597 = vmatpush2.msra.mxu0 0.0
        %1598 = vmatprep.subr.mxu0 0.0
        %1599 = vmatpush2.msra.mxu0 0.0
        %1600 = vmatprep.subr.mxu0 0.0
        %1601 = vmatpush2.msra.mxu0 0.0
        %1602 = vmatprep.subr.mxu0 0.0
        %1603 = vmatpush2.msra.mxu0 0.0
        %1604 = vmatprep.subr.mxu0 0.0
        %1605 = vmatpush2.msra.mxu0 0.0
        %1606 = vmatprep.subr.mxu0 0.0
        %1607 = vmatpush2.msra.mxu0 0.0
        %1608 = vmatprep.subr.mxu0 0.0
        %1609 = vmatpush2.msra.mxu0 0.0
        %1610 = vmatprep.subr.mxu0 0.0
        %1611 = vmatpush2.msra.mxu0 0.0
        %1612 = vmatprep.subr.mxu0 0.0
        %1613 = vmatpush2.msra.mxu0 0.0
        %1614 = vmatprep.subr.mxu0 0.0
        %1615 = vmatpush2.msra.mxu0 0.0
        %1616 = vmatprep.subr.mxu0 0.0
        %1617 = vmatpush2.msra.mxu0 0.0
        %1618 = vmatprep.subr.mxu0 0.0
        %1619 = vmatpush2.msra.mxu0 0.0
        %1620 = vmatprep.subr.mxu0 0.0
        %1621 = vmatpush2.msra.mxu0 0.0
        %1622 = vmatprep.subr.mxu0 0.0
        %1623 = vmatpush2.msra.mxu0 0.0
        %1624 = vmatprep.mubr.f32.mxu0 0.0
        %1625 = vmatmul.mubr.f32.gmra.mxu0 %v1558
        %v1626 = vpop.f32.mrf.mxu0
        %v1627 = vadd.f32 0.0, %v1626
        %v1628 = vpop.f32.mrf.mxu0
        %1629 = vdwg.mxu0
        %v1631 = vsel %vm1357, %v1401, 0
        %1633 = vmatprep.subr.mxu0 0.0
        %1634 = vmatpush1.msra.mxu0 0.0
        %1635 = vmatprep.subr.mxu0 0.0
        %1636 = vmatpush1.msra.mxu0 0.0
        %1637 = vmatprep.subr.mxu0 0.0
        %1638 = vmatpush1.msra.mxu0 0.0
        %1639 = vmatprep.subr.mxu0 0.0
        %1640 = vmatpush1.msra.mxu0 0.0
        %1641 = vmatprep.subr.mxu0 0.0
        %1642 = vmatpush1.msra.mxu0 0.0
        %1643 = vmatprep.subr.mxu0 0.0
        %1644 = vmatpush1.msra.mxu0 0.0
        %1645 = vmatprep.subr.mxu0 0.0
        %1646 = vmatpush1.msra.mxu0 0.0
        %1647 = vmatprep.subr.mxu0 0.0
        %1648 = vmatpush1.msra.mxu0 0.0
        %1649 = vmatprep.subr.mxu0 0.0
        %1650 = vmatpush1.msra.mxu0 0.0
        %1651 = vmatprep.subr.mxu0 0.0
        %1652 = vmatpush1.msra.mxu0 0.0
        %1653 = vmatprep.subr.mxu0 0.0
        %1654 = vmatpush1.msra.mxu0 0.0
        %1655 = vmatprep.subr.mxu0 0.0
        %1656 = vmatpush1.msra.mxu0 0.0
        %1657 = vmatprep.subr.mxu0 0.0
        %1658 = vmatpush1.msra.mxu0 0.0
        %1659 = vmatprep.subr.mxu0 0.0
        %1660 = vmatpush1.msra.mxu0 0.0
        %1661 = vmatprep.subr.mxu0 0.0
        %1662 = vmatpush1.msra.mxu0 %v1410
        %1663 = vmatprep.subr.mxu0 0.0
        %1664 = vmatpush1.msra.mxu0 %v1409
        %1665 = vmatprep.subr.mxu0 0.0
        %1666 = vmatpush2.msra.mxu0 0.0
        %1667 = vmatprep.subr.mxu0 0.0
        %1668 = vmatpush2.msra.mxu0 0.0
        %1669 = vmatprep.subr.mxu0 0.0
        %1670 = vmatpush2.msra.mxu0 0.0
        %1671 = vmatprep.subr.mxu0 0.0
        %1672 = vmatpush2.msra.mxu0 0.0
        %1673 = vmatprep.subr.mxu0 0.0
        %1674 = vmatpush2.msra.mxu0 0.0
        %1675 = vmatprep.subr.mxu0 0.0
        %1676 = vmatpush2.msra.mxu0 0.0
        %1677 = vmatprep.subr.mxu0 0.0
        %1678 = vmatpush2.msra.mxu0 0.0
        %1679 = vmatprep.subr.mxu0 0.0
        %1680 = vmatpush2.msra.mxu0 0.0
        %1681 = vmatprep.subr.mxu0 0.0
        %1682 = vmatpush2.msra.mxu0 0.0
        %1683 = vmatprep.subr.mxu0 0.0
        %1684 = vmatpush2.msra.mxu0 0.0
        %1685 = vmatprep.subr.mxu0 0.0
        %1686 = vmatpush2.msra.mxu0 0.0
        %1687 = vmatprep.subr.mxu0 0.0
        %1688 = vmatpush2.msra.mxu0 0.0
        %1689 = vmatprep.subr.mxu0 0.0
        %1690 = vmatpush2.msra.mxu0 0.0
        %1691 = vmatprep.subr.mxu0 0.0
        %1692 = vmatpush2.msra.mxu0 0.0
        %1693 = vmatprep.subr.mxu0 0.0
        %1694 = vmatpush2.msra.mxu0 0.0
        %1695 = vmatprep.subr.mxu0 0.0
        %1696 = vmatpush2.msra.mxu0 0.0
        %1697 = vmatprep.mubr.f32.mxu0 0.0
        %1698 = vmatmul.mubr.f32.gmra.mxu0 %v1631
        %v1699 = vpop.f32.mrf.mxu0
        %v1700 = vadd.f32 0.0, %v1699
        %v1701 = vpop.f32.mrf.mxu0
        %1702 = vdwg.mxu0
        %1703 = vst.msk [vmem:[#allocation5] sm:$0xff] %vm1011, %v1481
        %1705 = vrot.lane.b32.xlu0 %v1554, 8
        %v1706 = vpop.permute.xlu0 %1705
        %vm1708 = vcmask 130112
        %1709 = vst.msk [vmem:[#allocation5] sm:$0xff] %vm1708, %v1706
        %1711 = vrot.lane.b32.xlu0 %v1627, 16
        %v1712 = vpop.permute.xlu0 %1711
        %vm1714 = vcmask 195712
        %1715 = vst.msk [vmem:[#allocation5] sm:$0xff] %vm1714, %v1712
        %1717 = vrot.lane.b32.xlu0 %v1700, 24
        %v1718 = vpop.permute.xlu0 %1717
        %vm1720 = vcmask 261312
        %1721 = vst.msk [vmem:[#allocation5] sm:$0xff] %vm1720, %v1718
        %v1722 = vld [vmem:[#allocation5] sm:$0xff]
        %v1723 = vld [vmem:[#allocation17] sm:$0xff]
        %v1724 = vld [vmem:[#allocation17 + $0x8] sm:$0xff]
        %v1725 = vld [vmem:[#allocation17 + $0x10] sm:$0xff]
        %v1726 = vld [vmem:[#allocation17 + $0x18] sm:$0xff]
        %v1727 = vld [vmem:[%s10] sm:$0x1]
        %v1729 = vlaneseq
        %v1730 = vshrl.u32 %v1729, 7
        %v1731 = vsub.s32 0, %v1730
        %v1732 = vrot.slane %v1727, %v1731
        %v1735 = vsel %vm937, %v1722, 0
        %1737 = vmatprep.subr.mxu0 0.0
        %1738 = vmatpush1.msra.mxu0 0.0
        %1739 = vmatprep.subr.mxu0 0.0
        %1740 = vmatpush1.msra.mxu0 0.0
        %1741 = vmatprep.subr.mxu0 0.0
        %1742 = vmatpush1.msra.mxu0 0.0
        %1743 = vmatprep.subr.mxu0 0.0
        %1744 = vmatpush1.msra.mxu0 0.0
        %1745 = vmatprep.subr.mxu0 0.0
        %1746 = vmatpush1.msra.mxu0 0.0
        %1747 = vmatprep.subr.mxu0 0.0
        %1748 = vmatpush1.msra.mxu0 0.0
        %1749 = vmatprep.subr.mxu0 0.0
        %1750 = vmatpush1.msra.mxu0 0.0
        %1751 = vmatprep.subr.mxu0 0.0
        %1752 = vmatpush1.msra.mxu0 0.0
        %1753 = vmatprep.subr.mxu0 0.0
        %1754 = vmatpush1.msra.mxu0 0.0
        %1755 = vmatprep.subr.mxu0 0.0
        %1756 = vmatpush1.msra.mxu0 0.0
        %1757 = vmatprep.subr.mxu0 0.0
        %1758 = vmatpush1.msra.mxu0 0.0
        %1759 = vmatprep.subr.mxu0 0.0
        %1760 = vmatpush1.msra.mxu0 0.0
        %1761 = vmatprep.subr.mxu0 0.0
        %1762 = vmatpush1.msra.mxu0 %v1726
        %1763 = vmatprep.subr.mxu0 0.0
        %1764 = vmatpush1.msra.mxu0 %v1725
        %1765 = vmatprep.subr.mxu0 0.0
        %1766 = vmatpush1.msra.mxu0 %v1724
        %1767 = vmatprep.subr.mxu0 0.0
        %1768 = vmatpush1.msra.mxu0 %v1723
        %1769 = vmatprep.subr.mxu0 0.0
        %1770 = vmatpush2.msra.mxu0 0.0
        %1771 = vmatprep.subr.mxu0 0.0
        %1772 = vmatpush2.msra.mxu0 0.0
        %1773 = vmatprep.subr.mxu0 0.0
        %1774 = vmatpush2.msra.mxu0 0.0
        %1775 = vmatprep.subr.mxu0 0.0
        %1776 = vmatpush2.msra.mxu0 0.0
        %1777 = vmatprep.subr.mxu0 0.0
        %1778 = vmatpush2.msra.mxu0 0.0
        %1779 = vmatprep.subr.mxu0 0.0
        %1780 = vmatpush2.msra.mxu0 0.0
        %1781 = vmatprep.subr.mxu0 0.0
        %1782 = vmatpush2.msra.mxu0 0.0
        %1783 = vmatprep.subr.mxu0 0.0
        %1784 = vmatpush2.msra.mxu0 0.0
        %1785 = vmatprep.subr.mxu0 0.0
        %1786 = vmatpush2.msra.mxu0 0.0
        %1787 = vmatprep.subr.mxu0 0.0
        %1788 = vmatpush2.msra.mxu0 0.0
        %1789 = vmatprep.subr.mxu0 0.0
        %1790 = vmatpush2.msra.mxu0 0.0
        %1791 = vmatprep.subr.mxu0 0.0
        %1792 = vmatpush2.msra.mxu0 0.0
        %1793 = vmatprep.subr.mxu0 0.0
        %1794 = vmatpush2.msra.mxu0 0.0
        %1795 = vmatprep.subr.mxu0 0.0
        %1796 = vmatpush2.msra.mxu0 0.0
        %1797 = vmatprep.subr.mxu0 0.0
        %1798 = vmatpush2.msra.mxu0 0.0
        %1799 = vmatprep.subr.mxu0 0.0
        %1800 = vmatpush2.msra.mxu0 0.0
        %1801 = vmatprep.mubr.f32.mxu0 0.0
        %1802 = vmatmul.mubr.f32.gmra.mxu0 %v1735
        %v1803 = vpop.f32.mrf.mxu0
        %v1804 = vadd.f32 %v1732, %v1803
        %v1805 = vpop.f32.mrf.mxu0
        %1806 = vdwg.mxu0
        %1807 = vst.msk [vmem:[%s643] sm:$0xff] %vm937, %v1804
        %s1808 = sand.u32 %s313, 1
        %s1809 = scalar_lea.sflag [#allocation8], %s1808
        %s1810 = sand.u32 %s313, 1
        %s1811 = smul.addr %s1810, 8
        %s1812 = scalar_lea.vmem [#allocation18], %s1811
        %s1813 = sand.u32 %s43, 1
        %s1814 = scalar_lea.sflag [#allocation20], %s1813
        %s1815 = sand.u32 %s341, 1
        %s1816 = smul.addr %s1815, 8
        %s1817 = scalar_lea.vmem [#allocation19], %s1816
        %s1818 = sand.u32 %s43, 1
        %s1819 = scalar_lea.sflag [#allocation20], %s1818
        %s1820 = sand.u32 %s367, 1
        %s1821 = smul.addr %s1820, 16
        %s1822 = scalar_lea.vmem [#allocation21], %s1821
        %s1823 = sand.u32 %s393, 1
        %s1824 = scalar_lea.sflag [#allocation23], %s1823
        %s1825 = sand.u32 %s393, 1
        %s1826 = smul.addr %s1825, 16
        %s1827 = scalar_lea.vmem [#allocation22], %s1826
        // Predicated region
        $region97: #{tpu_custom_call.1} parent=63 // pred_check
          %p1828 = pneg %p323
        $region98: #{tpu_custom_call.1} parent=63 // pred_check_branch
          %1830 = sbr.rel (%p1828) target = $region100
        $region99: #{tpu_custom_call.1} parent=63 // pred_region
          %s1832 = ssub.s32 128, 128
          %1833 = vsyncadd %s1809, %s1832
          %s1834 = sadd.s32 %s48, %s47
          %s1835 = smul.addr %s1834, 128
          %s1836 = scalar_lea.hbm %s11, %s1835
          %s1838 = sshll.u32 %s1812, 4
          %s1839 = int_to_ptr.vmem [resolvable:$true] %s1838
          %1841 = dma.vmem_to_hbm [thread:$0]  %s1839, 128, %s1836, %s1809
        $region100: #{tpu_custom_call.1} parent=63 // pred_fallthru
          _
        // Predicated region
        $region101: #{tpu_custom_call.1} parent=63 // pred_check
          %p1842 = pneg %p351
        $region102: #{tpu_custom_call.1} parent=63 // pred_check_branch
          %1844 = sbr.rel (%p1842) target = $region104
        $region103: #{tpu_custom_call.1} parent=63 // pred_region
          %s1846 = ssub.s32 128, 128
          %1847 = vsyncadd %s1814, %s1846
          %s1848 = sadd.s32 %s48, %s47
          %s1849 = smul.addr %s1848, 128
          %s1850 = scalar_lea.hbm %s12, %s1849
          %s1852 = sshll.u32 %s1817, 4
          %s1853 = int_to_ptr.vmem [resolvable:$true] %s1852
          %1855 = dma.vmem_to_hbm [thread:$0]  %s1853, 128, %s1850, %s1814
        $region104: #{tpu_custom_call.1} parent=63 // pred_fallthru
          _
        // Predicated region
        $region105: #{tpu_custom_call.1} parent=63 // pred_check
          %p1856 = pneg %p377
        $region106: #{tpu_custom_call.1} parent=63 // pred_check_branch
          %1858 = sbr.rel (%p1856) target = $region108
        $region107: #{tpu_custom_call.1} parent=63 // pred_region
          %s1860 = ssub.s32 256, 256
          %1861 = vsyncadd %s1819, %s1860
          %s1862 = smul.addr %s47, 2
          %s1863 = smul.addr %s1862, 128
          %s1864 = scalar_lea.hbm %s13, %s1863
          %s1865 = sshll.u32 %s1822, 4
          %s1866 = int_to_ptr.vmem [resolvable:$true] %s1865
          %1871 = dma.vmem_to_hbm [thread:$0]  %s1866, 256, %s1864, %s1819, 128, 128, 8
        $region108: #{tpu_custom_call.1} parent=63 // pred_fallthru
          _
        // Predicated region
        $region109: #{tpu_custom_call.1} parent=63 // pred_check
          %p1872 = pneg %p403
        $region110: #{tpu_custom_call.1} parent=63 // pred_check_branch
          %1874 = sbr.rel (%p1872) target = $region112
        $region111: #{tpu_custom_call.1} parent=63 // pred_region
          %s1876 = ssub.s32 256, 256
          %1877 = vsyncadd %s1824, %s1876
          %s1878 = smul.addr %s47, 2
          %s1879 = smul.addr %s1878, 128
          %s1880 = scalar_lea.hbm %s14, %s1879
          %s1881 = sshll.u32 %s1827, 4
          %s1882 = int_to_ptr.vmem [resolvable:$true] %s1881
          %1887 = dma.vmem_to_hbm [thread:$0]  %s1882, 256, %s1880, %s1824, 128, 128, 8
        $region112: #{tpu_custom_call.1} parent=63 // pred_fallthru
          _
      $region64: #{tpu_custom_call.1} parent=5 // pred_fallthru
        _
      %p1888 = scmp.le.s32.totalorder 2, %s38
      // Predicated region
      $region113: #{tpu_custom_call.1} parent=5 // pred_check
        %p1889 = pneg %p1888
      $region114: #{tpu_custom_call.1} parent=5 // pred_check_branch
        %1891 = sbr.rel (%p1889) target = $region116
      $region115: #{tpu_custom_call.1} parent=5 // pred_region
        %s1892 = ssub.s32 %s38, 2
        // Predicated region
        $region117: #{tpu_custom_call.1} parent=115 // pred_check
          %p1893 = pneg %p329
        $region118: #{tpu_custom_call.1} parent=115 // pred_check_branch
          %1895 = sbr.rel (%p1893) target = $region120
        $region119: #{tpu_custom_call.1} parent=115 // pred_region
          %s1896 = sand.u32 %s314, 1
          %s1897 = scalar_lea.sflag [#allocation8], %s1896
          %s1898 = sand.u32 %s314, 1
          %s1899 = smul.addr %s1898, 8
          %s1900 = scalar_lea.vmem [#allocation18], %s1899
          %1901 = dma.done %s1897, 128
        $region120: #{tpu_custom_call.1} parent=115 // pred_fallthru
          _
        // Predicated region
        $region121: #{tpu_custom_call.1} parent=115 // pred_check
          %p1902 = pneg %p357
        $region122: #{tpu_custom_call.1} parent=115 // pred_check_branch
          %1904 = sbr.rel (%p1902) target = $region124
        $region123: #{tpu_custom_call.1} parent=115 // pred_region
          %s1905 = sand.u32 %s44, 1
          %s1906 = scalar_lea.sflag [#allocation20], %s1905
          %s1907 = sand.u32 %s342, 1
          %s1908 = smul.addr %s1907, 8
          %s1909 = scalar_lea.vmem [#allocation19], %s1908
          %1910 = dma.done %s1906, 128
        $region124: #{tpu_custom_call.1} parent=115 // pred_fallthru
          _
        // Predicated region
        $region125: #{tpu_custom_call.1} parent=115 // pred_check
          %p1911 = pneg %p383
        $region126: #{tpu_custom_call.1} parent=115 // pred_check_branch
          %1913 = sbr.rel (%p1911) target = $region128
        $region127: #{tpu_custom_call.1} parent=115 // pred_region
          %s1914 = sand.u32 %s44, 1
          %s1915 = scalar_lea.sflag [#allocation20], %s1914
          %s1916 = sand.u32 %s368, 1
          %s1917 = smul.addr %s1916, 16
          %s1918 = scalar_lea.vmem [#allocation21], %s1917
          %1919 = dma.done %s1915, 256
        $region128: #{tpu_custom_call.1} parent=115 // pred_fallthru
          _
        // Predicated region
        $region129: #{tpu_custom_call.1} parent=115 // pred_check
          %p1920 = pneg %p409
        $region130: #{tpu_custom_call.1} parent=115 // pred_check_branch
          %1922 = sbr.rel (%p1920) target = $region132
        $region131: #{tpu_custom_call.1} parent=115 // pred_region
          %s1923 = sand.u32 %s394, 1
          %s1924 = scalar_lea.sflag [#allocation23], %s1923
          %s1925 = sand.u32 %s394, 1
          %s1926 = smul.addr %s1925, 16
          %s1927 = scalar_lea.vmem [#allocation22], %s1926
          %1928 = dma.done %s1924, 256
        $region132: #{tpu_custom_call.1} parent=115 // pred_fallthru
          _
      $region116: #{tpu_custom_call.1} parent=5 // pred_fallthru
        _
    $region6: #{tpu_custom_call.1} parent=1 // loop_footer
      %s42 = sadd.s32 1, %s38
    $region7: #{tpu_custom_call.1} parent=1 // loop_footer_branch
      %37 = sbr.rel target = $region3
    $region8: #{tpu_custom_call.1} parent=1 // loop_exit
      _
    %1929 = vsyncpa [#allocation7], 1
    %s1930 = scalar_lea.sflag [#allocation7], 1
    %1931 = vsyncpa %s1930, 1
    %1932 = vsyncpa [#allocation10], 1
    %s1933 = scalar_lea.sflag [#allocation10], 1
    %1934 = vsyncpa %s1933, 1
    %1935 = vsyncpa [#allocation13], 1
    %1936 = vsyncpa [#allocation16], 1
    %1937 = vsyncpa [#allocation8], 1
    %s1938 = scalar_lea.sflag [#allocation8], 1
    %1939 = vsyncpa %s1938, 1
    %1940 = vsyncpa [#allocation20], 1
    %s1941 = scalar_lea.sflag [#allocation20], 1
    %1942 = vsyncpa %s1941, 1
    %1943 = vsyncpa [#allocation23], 1
    %s1944 = scalar_lea.sflag [#allocation23], 1
    %1945 = vsyncpa %s1944, 1

</llo_original>
